<compile_context>
chip_gen: v6e
topology: v6e:2x2x1
jax: 0.10.0
libtpu: 0.0.40
codegen_flags: <defaults>
</compile_context>

<pallas_src>
import functools

import jax
import jax.numpy as jnp
from jax import lax
from jax.experimental import pallas as pl
from jax.experimental.pallas import tpu as pltpu


def _round_up(x, m):
    return (x + m - 1) // m * m


def _vmem_limit_bytes():
    """Generation-aware VMEM limit: 3/4 of physical per-core VMEM."""
    try:
        info = pltpu.get_tpu_info()
        cap = getattr(info, "vmem_capacity_bytes", None)
        if cap:
            return int(cap) * 3 // 4
    except Exception:
        pass
    return 48 * 1024 * 1024  # conservative default that fits v7x's 64 MiB/TC


def _default_chunk_len(T, Bb, D, H, Gp, vmem_limit_bytes):
    """Largest Tc whose per-chunk working set stays well inside VMEM."""
    per_t = Bb * (2 * (D * 4) * 2      # x + mask blocks, f32, double-buffered
                  + (H * 4) * 2        # y block, f32, double-buffered
                  + Gp * 2)            # GI scratch, bf16
    budget = max(vmem_limit_bytes // 4, 1)
    return int(max(1, min(T, budget // max(per_t, 1), 512)))


def _gru_kernel(x_ref, m_ref, w_ih_ref, b_gi_ref, w_hh_ref, b_hhn_ref,
                y_ref, gi_ref, h_ref, *, Tc, Bb, D, H, Hs, Gp):
    """One (batch-block, time-chunk) grid step.

    x_ref, m_ref: (Tc, Bb, D)   f32   raw inputs + dropout mask for this chunk
    w_ih_ref:     (D, Gp)       bf16  gate-slab input weights
    b_gi_ref:     (1, Gp)       f32   b_ih (+ b_hh for the r, z gates)
    w_hh_ref:     (H, Gp)       bf16  gate-slab hidden weights
    b_hhn_ref:    (1, H)        f32   b_hh for the n gate (stays inside r*(...))
    y_ref:        (Tc, Bb, H)   f32   hidden states for this chunk
    gi_ref:       (Tc*Bb, Gp)   bf16  scratch: hoisted input projection
    h_ref:        (Bb, H)       f32   scratch: hidden state carried over chunks
    """
    f32, bf16 = jnp.float32, jnp.bfloat16

    # Reset the carried hidden state at the first time-chunk of a batch block.
    @pl.when(pl.program_id(1) == 0)
    def _():
        h_ref[...] = jnp.zeros_like(h_ref)

    # Phase 1: hoisted input projection for the whole chunk — ONE bf16 MXU
    # matmul (Tc*Bb, D) @ (D, Gp), with the input-dropout multiply fused in.
    xm = (x_ref[...] * m_ref[...]).reshape(Tc * Bb, D).astype(bf16)
    gi_ref[...] = (jnp.dot(xm, w_ih_ref[...], preferred_element_type=f32)
                   + b_gi_ref[...]).astype(gi_ref.dtype)

    # Hoisted out of the serial loop (JAX does not CSE broadcast_in_dim).
    b_hhn = jnp.broadcast_to(b_hhn_ref[...], (Bb, H)).astype(f32)

    # Phase 2: serial recurrence — only h @ W_hh remains per step.
    # TODO(synk): cast the sigmoid/tanh pre-activations to bf16 on v6e/v7x
    #             (packed EUP) once tolerances are re-validated; keep f32 here.
    # TODO(synk): sub-tile the gate elementwise math over <=32-sublane blocks
    #             so Bb can grow toward the full MXU row count without spills.
    def step(t, h):
        row = pl.multiple_of(t * Bb, Bb)
        gi = gi_ref[pl.ds(row, Bb), :].astype(f32)                    # (Bb, Gp)
        gh = jnp.dot(h.astype(bf16), w_hh_ref[...],
                     preferred_element_type=f32)                      # (Bb, Gp)
        # PyTorch gate order r, z, n; gate g lives in lanes [g*Hs, g*Hs + H).
        r = jax.nn.sigmoid(gi[:, 0:H] + gh[:, 0:H])
        z = jax.nn.sigmoid(gi[:, Hs:Hs + H] + gh[:, Hs:Hs + H])
        n = jnp.tanh(gi[:, 2 * Hs:2 * Hs + H]
                     + r * (gh[:, 2 * Hs:2 * Hs + H] + b_hhn))
        h_new = (1.0 - z) * n + z * h
        y_ref[t] = h_new.astype(y_ref.dtype)
        return h_new

    h_final = lax.fori_loop(0, Tc, step, h_ref[...], unroll=min(Tc, 4))
    h_ref[...] = h_final


def gru_forward(x, drop_mask, w_ih, w_hh, b_ih, b_hh, *, tc=None):
    """x, drop_mask: (T, B, D); w_ih: (3H, D); w_hh: (3H, H); b_*: (3H,)."""
    T, B, D = x.shape
    H = w_hh.shape[1]
    f32, bf16 = jnp.float32, jnp.bfloat16

    x = jnp.asarray(x, f32)
    drop_mask = jnp.asarray(drop_mask, f32)
    w_ih = jnp.asarray(w_ih, f32)
    w_hh = jnp.asarray(w_hh, f32)
    b_ih = jnp.asarray(b_ih, f32)
    b_hh = jnp.asarray(b_hh, f32)

    # Batch blocking: 16-row granule keeps the bf16 GI scratch tile-aligned;
    # batch blocks form a "parallel" grid axis (sharded on v7x's 2 TCs).
    Bp = _round_up(max(B, 1), 16)
    Bb = Bp if Bp <= 32 else 32
    Bp = _round_up(Bp, Bb)
    nB = Bp // Bb

    # Gate-slab layout: pack the 3 gates contiguously into one 128-lane slab
    # when they fit (small H); otherwise one 128-aligned slab per gate.
    Hs = H if 3 * H <= 128 else _round_up(H, 128)
    Gp = _round_up(3 * Hs, 128)

    vmem_limit = _vmem_limit_bytes()
    if tc is None:
        tc = _default_chunk_len(T, Bb, D, H, Gp, vmem_limit)
    Tc = int(max(1, min(tc, T)))
    T_pad = _round_up(T, Tc)
    nT = T_pad // Tc

    # Pad batch / time only; the dropout multiply and bf16 cast happen in-kernel.
    x_p = jnp.zeros((T_pad, Bp, D), f32).at[:T, :B].set(x)
    m_p = jnp.zeros((T_pad, Bp, D), f32).at[:T, :B].set(drop_mask)
    # TODO(synk): generate the dropout mask in-kernel with pltpu.prng_* to
    #             drop the mask HBM stream (kept host-provided for determinism).

    # Gate-slab weights/biases: gate g occupies columns [g*Hs, g*Hs + H).
    w_ih_p = jnp.zeros((D, Gp), f32)
    w_hh_p = jnp.zeros((H, Gp), f32)
    b_gi = jnp.zeros((1, Gp), f32)
    for g in range(3):
        c0 = g * Hs
        w_ih_p = w_ih_p.at[:, c0:c0 + H].set(w_ih[g * H:(g + 1) * H, :].T)
        w_hh_p = w_hh_p.at[:, c0:c0 + H].set(w_hh[g * H:(g + 1) * H, :].T)
        bias = b_ih[g * H:(g + 1) * H]
        if g < 2:  # b_hh for r, z folds into GI; b_hh_n must stay in r*(...)
            bias = bias + b_hh[g * H:(g + 1) * H]
        b_gi = b_gi.at[0, c0:c0 + H].set(bias)
    w_ih_p = w_ih_p.astype(bf16)
    w_hh_p = w_hh_p.astype(bf16)
    b_hhn = b_hh[2 * H:3 * H].reshape(1, H)

    kernel = functools.partial(_gru_kernel, Tc=Tc, Bb=Bb, D=D, H=H, Hs=Hs, Gp=Gp)

    y_pad = pl.pallas_call(
        kernel,
        out_shape=jax.ShapeDtypeStruct((T_pad, Bp, H), f32),
        grid=(nB, nT),
        in_specs=[
            pl.BlockSpec((Tc, Bb, D), lambda b, t: (t, b, 0)),   # x
            pl.BlockSpec((Tc, Bb, D), lambda b, t: (t, b, 0)),   # dropout mask
            pl.BlockSpec((D, Gp), lambda b, t: (0, 0)),          # W_ih slabs
            pl.BlockSpec((1, Gp), lambda b, t: (0, 0)),          # b_gi
            pl.BlockSpec((H, Gp), lambda b, t: (0, 0)),          # W_hh slabs
            pl.BlockSpec((1, H), lambda b, t: (0, 0)),           # b_hh (n gate)
        ],
        out_specs=pl.BlockSpec((Tc, Bb, H), lambda b, t: (t, b, 0)),
        scratch_shapes=[
            pltpu.VMEM((Tc * Bb, Gp), bf16),   # hoisted input projection (GI)
            pltpu.VMEM((Bb, H), f32),          # hidden state carried over chunks
        ],
        compiler_params=pltpu.CompilerParams(
            dimension_semantics=("parallel", "arbitrary"),
            vmem_limit_bytes=vmem_limit),
    )(x_p, m_p, w_ih_p, b_gi, w_hh_p, b_hhn)

    y = y_pad[:T, :B, :]
    h_n = y[-1]
    return y, h_n


def gru_reference(x, drop_mask, w_ih, w_hh, b_ih, b_hh, *, emulate_kernel=False):
    """Pure-JAX reference matching PyTorch nn.GRU equations.

    emulate_kernel=True mirrors the kernel arithmetic (bf16 matmul operands
    with f32 accumulation, bf16-stored input projection with the r/z hidden
    bias folded in) for a tight numerical check; False gives strict f32
    PyTorch semantics.
    """
    T, B, D = x.shape
    H = w_hh.shape[1]
    f32, bf16 = jnp.float32, jnp.bfloat16
    mm = bf16 if emulate_kernel else f32
    if emulate_kernel:
        gi_bias = jnp.concatenate([b_ih[:2 * H] + b_hh[:2 * H], b_ih[2 * H:]])
    else:
        gi_bias = b_ih
    xm = (x * drop_mask).astype(f32)
    h = jnp.zeros((B, H), f32)
    ys = []
    for t in range(T):
        gi = jnp.dot(xm[t].astype(mm), w_ih.T.astype(mm),
                     preferred_element_type=f32) + gi_bias
        gh = jnp.dot(h.astype(mm), w_hh.T.astype(mm),
                     preferred_element_type=f32)
        if emulate_kernel:
            gi = gi.astype(bf16).astype(f32)       # bf16 GI storage
        else:
            gh = gh + b_hh
        r = jax.nn.sigmoid(gi[:, :H] + gh[:, :H])
        z = jax.nn.sigmoid(gi[:, H:2 * H] + gh[:, H:2 * H])
        if emulate_kernel:
            n = jnp.tanh(gi[:, 2 * H:] + r * (gh[:, 2 * H:] + b_hh[2 * H:]))
        else:
            n = jnp.tanh(gi[:, 2 * H:] + r * gh[:, 2 * H:])
        h = (1.0 - z) * n + z * h
        ys.append(h)
    return jnp.stack(ys, 0), h


if __name__ == "__main__":
    # baseRNN(vocab_size, hidden_size, input_dropout_p, output_dropout_p,
    #         n_layers, rnn_cell='gru') — implied single-layer GRU forward.
    vocab_size = 50          # unused in this forward (no embedding in base class)
    hidden_size = 32
    input_dropout_p = 0.1
    n_layers = 1             # TODO(synk): n_layers > 1 stacking not implemented
    T, B = 8, 2
    D = hidden_size          # GRU input size == hidden_size in this base model

    key = jax.random.PRNGKey(0)
    k_x, k_wi, k_wh, k_bi, k_bh, k_drop = jax.random.split(key, 6)

    x = jax.random.normal(k_x, (T, B, D), jnp.float32)

    # PyTorch-style uniform(-1/sqrt(H), 1/sqrt(H)) init, gate order (r, z, n).
    bound = 1.0 / jnp.sqrt(jnp.float32(hidden_size))
    w_ih = jax.random.uniform(k_wi, (3 * hidden_size, D), jnp.float32, -bound, bound)
    w_hh = jax.random.uniform(k_wh, (3 * hidden_size, hidden_size), jnp.float32,
                              -bound, bound)
    b_ih = jax.random.uniform(k_bi, (3 * hidden_size,), jnp.float32, -bound, bound)
    b_hh = jax.random.uniform(k_bh, (3 * hidden_size,), jnp.float32, -bound, bound)

    # Deterministic input-dropout mask (train-mode semantics: keep / (1 - p)).
    keep = (jax.random.uniform(k_drop, (T, B, D)) >= input_dropout_p)
    drop_mask = keep.astype(jnp.float32) / (1.0 - input_dropout_p)

    # tc=4 forces two time-chunks so the carried-hidden-state path is exercised.
    y, h_n = gru_forward(x, drop_mask, w_ih, w_hh, b_ih, b_hh, tc=4)
    y = jax.block_until_ready(y)
    h_n = jax.block_until_ready(h_n)

    # Tight check against a reference that mirrors the kernel arithmetic.
    y_emu, h_emu = gru_reference(x, drop_mask, w_ih, w_hh, b_ih, b_hh,
                                 emulate_kernel=True)
    assert jnp.allclose(y, y_emu, atol=5e-3, rtol=5e-3), "kernel-emulation y mismatch"
    assert jnp.allclose(h_n, h_emu, atol=5e-3, rtol=5e-3), "kernel-emulation h mismatch"

    # Looser check against the strict-f32 PyTorch-semantics reference.
    y_f32, h_f32 = gru_reference(x, drop_mask, w_ih, w_hh, b_ih, b_hh)
    assert jnp.allclose(y, y_f32, atol=5e-2, rtol=5e-2), "f32-ref output mismatch"
    assert jnp.allclose(h_n, h_f32, atol=5e-2, rtol=5e-2), "f32-ref hidden mismatch"

    assert y.shape == (T, B, hidden_size) and h_n.shape == (B, hidden_size)
    print("KERNEL_OK")
</pallas_src>

<mosaic_0001>
module attributes {stable_mosaic.version = 11 : i64} {
  func.func @_gru_kernel(%arg0: i32, %arg1: i32, %arg2: memref<4x16x32xf32, #tpu.memory_space<vmem>>, %arg3: memref<4x16x32xf32, #tpu.memory_space<vmem>>, %arg4: memref<32x128xbf16, #tpu.memory_space<vmem>>, %arg5: memref<1x128xf32, #tpu.memory_space<vmem>>, %arg6: memref<32x128xbf16, #tpu.memory_space<vmem>>, %arg7: memref<1x32xf32, #tpu.memory_space<vmem>>, %arg8: memref<4x16x32xf32, #tpu.memory_space<vmem>>, %arg9: memref<64x128xbf16, #tpu.memory_space<vmem>>, %arg10: memref<16x32xf32, #tpu.memory_space<vmem>>) attributes {dimension_semantics = [#tpu.dimension_semantics<parallel>, #tpu.dimension_semantics<arbitrary>], iteration_bounds = array<i64: 1, 2>, scalar_prefetch = 0 : i64, scratch_operands = 2 : i64, tpu.core_type = #tpu.core_type<tc>, window_params = [{transform_indices = @transform_0, window_bounds = array<i64: 4, 16, 32>}, {transform_indices = @transform_1, window_bounds = array<i64: 4, 16, 32>}, {pipeline_mode = #tpu.pipeline_mode<synchronous>, transform_indices = @transform_2, window_bounds = array<i64: 32, 128>}, {pipeline_mode = #tpu.pipeline_mode<synchronous>, transform_indices = @transform_3, window_bounds = array<i64: 1, 128>}, {pipeline_mode = #tpu.pipeline_mode<synchronous>, transform_indices = @transform_4, window_bounds = array<i64: 32, 128>}, {pipeline_mode = #tpu.pipeline_mode<synchronous>, transform_indices = @transform_5, window_bounds = array<i64: 1, 32>}, {transform_indices = @transform_6, window_bounds = array<i64: 4, 16, 32>}]} {
    %c0_i32 = arith.constant 0 : i32
    %0 = arith.cmpi eq, %arg1, %c0_i32 : i32
    %1 = arith.extui %0 : i1 to i32
    %c0_i32_0 = arith.constant 0 : i32
    %2 = arith.cmpi ne, %1, %c0_i32_0 : i32
    scf.if %2 {
      %cst_58 = arith.constant 0.000000e+00 : f32
      %176 = vector.broadcast %cst_58 : f32 to vector<16x32xf32>
      %c0_59 = arith.constant 0 : index
      %c0_60 = arith.constant 0 : index
      %177 = vector.load %arg10[%c0_59, %c0_60] : memref<16x32xf32, #tpu.memory_space<vmem>>, vector<16x32xf32>
      tpu.vector_store %arg10[%c0_59, %c0_60], %176 {strides = array<i32>} : memref<16x32xf32, #tpu.memory_space<vmem>>, vector<16x32xf32>,
    } else {
    }
    %c0 = arith.constant 0 : index
    %c0_1 = arith.constant 0 : index
    %c0_2 = arith.constant 0 : index
    %3 = vector.load %arg2[%c0, %c0_1, %c0_2] : memref<4x16x32xf32, #tpu.memory_space<vmem>>, vector<4x16x32xf32>
    %c0_3 = arith.constant 0 : index
    %c0_4 = arith.constant 0 : index
    %c0_5 = arith.constant 0 : index
    %4 = vector.load %arg3[%c0_3, %c0_4, %c0_5] : memref<4x16x32xf32, #tpu.memory_space<vmem>>, vector<4x16x32xf32>
    %5 = arith.mulf %3, %4 : vector<4x16x32xf32>
    %6 = vector.shape_cast %5 : vector<4x16x32xf32> to vector<64x32xf32>
    %7 = arith.truncf %6 : vector<64x32xf32> to vector<64x32xbf16>
    %c0_6 = arith.constant 0 : index
    %c0_7 = arith.constant 0 : index
    %8 = vector.load %arg4[%c0_6, %c0_7] : memref<32x128xbf16, #tpu.memory_space<vmem>>, vector<32x128xbf16>
    %cst = arith.constant dense<0.000000e+00> : vector<64x128xf32>
    %9 = tpu.matmul %7, %8, %cst {dimension_numbers = #tpu.dot_dimension_numbers<[1], [0], [0], [1], [0, 0, 1, 1], [], []>} : vector<64x32xbf16>, vector<32x128xbf16>, vector<64x128xf32> -> vector<64x128xf32>
    %c0_8 = arith.constant 0 : index
    %c0_9 = arith.constant 0 : index
    %10 = vector.load %arg5[%c0_8, %c0_9] : memref<1x128xf32, #tpu.memory_space<vmem>>, vector<1x128xf32>
    %11 = vector.broadcast %10 : vector<1x128xf32> to vector<64x128xf32>
    %12 = arith.addf %9, %11 : vector<64x128xf32>
    %13 = arith.truncf %12 : vector<64x128xf32> to vector<64x128xbf16>
    %c0_10 = arith.constant 0 : index
    %c0_11 = arith.constant 0 : index
    %14 = vector.load %arg9[%c0_10, %c0_11] : memref<64x128xbf16, #tpu.memory_space<vmem>>, vector<64x128xbf16>
    tpu.vector_store %arg9[%c0_10, %c0_11], %13 {strides = array<i32>} : memref<64x128xbf16, #tpu.memory_space<vmem>>, vector<64x128xbf16>,
    %c0_12 = arith.constant 0 : index
    %c0_13 = arith.constant 0 : index
    %15 = vector.load %arg7[%c0_12, %c0_13] : memref<1x32xf32, #tpu.memory_space<vmem>>, vector<1x32xf32>
    %16 = vector.shape_cast %15 : vector<1x32xf32> to vector<1x32xf32>
    %17 = vector.broadcast %16 : vector<1x32xf32> to vector<16x32xf32>
    %c0_14 = arith.constant 0 : index
    %c0_15 = arith.constant 0 : index
    %18 = vector.load %arg10[%c0_14, %c0_15] : memref<16x32xf32, #tpu.memory_space<vmem>>, vector<16x32xf32>
    %c0_i32_16 = arith.constant 0 : i32
    %c16_i32 = arith.constant 16 : i32
    %19 = arith.muli %c0_i32_16, %c16_i32 : i32
    %20 = tpu.assume_multiple %19, 16 : i32
    %21 = arith.index_cast %20 : i32 to index
    %c0_17 = arith.constant 0 : index
    %22 = vector.load %arg9[%21, %c0_17] : memref<64x128xbf16, #tpu.memory_space<vmem>>, vector<16x128xbf16>
    %23 = arith.extf %22 : vector<16x128xbf16> to vector<16x128xf32>
    %24 = arith.truncf %18 : vector<16x32xf32> to vector<16x32xbf16>
    %c0_18 = arith.constant 0 : index
    %c0_19 = arith.constant 0 : index
    %25 = vector.load %arg6[%c0_18, %c0_19] : memref<32x128xbf16, #tpu.memory_space<vmem>>, vector<32x128xbf16>
    %cst_20 = arith.constant dense<0.000000e+00> : vector<16x128xf32>
    %26 = tpu.matmul %24, %25, %cst_20 {dimension_numbers = #tpu.dot_dimension_numbers<[1], [0], [0], [1], [0, 0, 1, 1], [], []>} : vector<16x32xbf16>, vector<32x128xbf16>, vector<16x128xf32> -> vector<16x128xf32>
    %27 = vector.extract_strided_slice %23 {offsets = [0, 0], sizes = [16, 32], strides = [1, 1]} : vector<16x128xf32> to vector<16x32xf32>
    %28 = vector.extract_strided_slice %26 {offsets = [0, 0], sizes = [16, 32], strides = [1, 1]} : vector<16x128xf32> to vector<16x32xf32>
    %29 = arith.addf %27, %28 : vector<16x32xf32>
    %30 = arith.negf %29 : vector<16x32xf32>
    %31 = math.exp %30 : vector<16x32xf32>
    %cst_21 = arith.constant 1.000000e+00 : f32
    %32 = vector.broadcast %cst_21 : f32 to vector<16x32xf32>
    %33 = arith.addf %32, %31 : vector<16x32xf32>
    %34 = arith.divf %32, %33 : vector<16x32xf32>
    %35 = vector.extract_strided_slice %23 {offsets = [0, 32], sizes = [16, 32], strides = [1, 1]} : vector<16x128xf32> to vector<16x32xf32>
    %36 = vector.extract_strided_slice %26 {offsets = [0, 32], sizes = [16, 32], strides = [1, 1]} : vector<16x128xf32> to vector<16x32xf32>
    %37 = arith.addf %35, %36 : vector<16x32xf32>
    %38 = arith.negf %37 : vector<16x32xf32>
    %39 = math.exp %38 : vector<16x32xf32>
    %cst_22 = arith.constant 1.000000e+00 : f32
    %40 = vector.broadcast %cst_22 : f32 to vector<16x32xf32>
    %41 = arith.addf %40, %39 : vector<16x32xf32>
    %42 = arith.divf %40, %41 : vector<16x32xf32>
    %43 = vector.extract_strided_slice %23 {offsets = [0, 64], sizes = [16, 32], strides = [1, 1]} : vector<16x128xf32> to vector<16x32xf32>
    %44 = vector.extract_strided_slice %26 {offsets = [0, 64], sizes = [16, 32], strides = [1, 1]} : vector<16x128xf32> to vector<16x32xf32>
    %45 = arith.addf %44, %17 : vector<16x32xf32>
    %46 = arith.mulf %34, %45 : vector<16x32xf32>
    %47 = arith.addf %43, %46 : vector<16x32xf32>
    %48 = math.tanh %47 : vector<16x32xf32>
    %cst_23 = arith.constant 1.000000e+00 : f32
    %49 = vector.broadcast %cst_23 : f32 to vector<16x32xf32>
    %50 = arith.subf %49, %42 : vector<16x32xf32>
    %51 = arith.mulf %50, %48 : vector<16x32xf32>
    %52 = arith.mulf %42, %18 : vector<16x32xf32>
    %53 = arith.addf %51, %52 : vector<16x32xf32>
    %54 = arith.index_cast %c0_i32_16 : i32 to index
    %c0_24 = arith.constant 0 : index
    %c0_25 = arith.constant 0 : index
    %55 = vector.load %arg8[%54, %c0_24, %c0_25] : memref<4x16x32xf32, #tpu.memory_space<vmem>>, vector<1x16x32xf32>
    %56 = vector.shape_cast %55 : vector<1x16x32xf32> to vector<16x32xf32>
    %57 = vector.shape_cast %53 : vector<16x32xf32> to vector<1x16x32xf32>
    tpu.vector_store %arg8[%54, %c0_24, %c0_25], %57 {strides = array<i32>} : memref<4x16x32xf32, #tpu.memory_space<vmem>>, vector<1x16x32xf32>,
    %c1_i32 = arith.constant 1 : i32
    %c16_i32_26 = arith.constant 16 : i32
    %58 = arith.muli %c1_i32, %c16_i32_26 : i32
    %59 = tpu.assume_multiple %58, 16 : i32
    %60 = arith.index_cast %59 : i32 to index
    %c0_27 = arith.constant 0 : index
    %61 = vector.load %arg9[%60, %c0_27] : memref<64x128xbf16, #tpu.memory_space<vmem>>, vector<16x128xbf16>
    %62 = arith.extf %61 : vector<16x128xbf16> to vector<16x128xf32>
    %63 = arith.truncf %53 : vector<16x32xf32> to vector<16x32xbf16>
    %c0_28 = arith.constant 0 : index
    %c0_29 = arith.constant 0 : index
    %64 = vector.load %arg6[%c0_28, %c0_29] : memref<32x128xbf16, #tpu.memory_space<vmem>>, vector<32x128xbf16>
    %cst_30 = arith.constant dense<0.000000e+00> : vector<16x128xf32>
    %65 = tpu.matmul %63, %64, %cst_30 {dimension_numbers = #tpu.dot_dimension_numbers<[1], [0], [0], [1], [0, 0, 1, 1], [], []>} : vector<16x32xbf16>, vector<32x128xbf16>, vector<16x128xf32> -> vector<16x128xf32>
    %66 = vector.extract_strided_slice %62 {offsets = [0, 0], sizes = [16, 32], strides = [1, 1]} : vector<16x128xf32> to vector<16x32xf32>
    %67 = vector.extract_strided_slice %65 {offsets = [0, 0], sizes = [16, 32], strides = [1, 1]} : vector<16x128xf32> to vector<16x32xf32>
    %68 = arith.addf %66, %67 : vector<16x32xf32>
    %69 = arith.negf %68 : vector<16x32xf32>
    %70 = math.exp %69 : vector<16x32xf32>
    %cst_31 = arith.constant 1.000000e+00 : f32
    %71 = vector.broadcast %cst_31 : f32 to vector<16x32xf32>
    %72 = arith.addf %71, %70 : vector<16x32xf32>
    %73 = arith.divf %71, %72 : vector<16x32xf32>
    %74 = vector.extract_strided_slice %62 {offsets = [0, 32], sizes = [16, 32], strides = [1, 1]} : vector<16x128xf32> to vector<16x32xf32>
    %75 = vector.extract_strided_slice %65 {offsets = [0, 32], sizes = [16, 32], strides = [1, 1]} : vector<16x128xf32> to vector<16x32xf32>
    %76 = arith.addf %74, %75 : vector<16x32xf32>
    %77 = arith.negf %76 : vector<16x32xf32>
    %78 = math.exp %77 : vector<16x32xf32>
    %cst_32 = arith.constant 1.000000e+00 : f32
    %79 = vector.broadcast %cst_32 : f32 to vector<16x32xf32>
    %80 = arith.addf %79, %78 : vector<16x32xf32>
    %81 = arith.divf %79, %80 : vector<16x32xf32>
    %82 = vector.extract_strided_slice %62 {offsets = [0, 64], sizes = [16, 32], strides = [1, 1]} : vector<16x128xf32> to vector<16x32xf32>
    %83 = vector.extract_strided_slice %65 {offsets = [0, 64], sizes = [16, 32], strides = [1, 1]} : vector<16x128xf32> to vector<16x32xf32>
    %84 = arith.addf %83, %17 : vector<16x32xf32>
    %85 = arith.mulf %73, %84 : vector<16x32xf32>
    %86 = arith.addf %82, %85 : vector<16x32xf32>
    %87 = math.tanh %86 : vector<16x32xf32>
    %cst_33 = arith.constant 1.000000e+00 : f32
    %88 = vector.broadcast %cst_33 : f32 to vector<16x32xf32>
    %89 = arith.subf %88, %81 : vector<16x32xf32>
    %90 = arith.mulf %89, %87 : vector<16x32xf32>
    %91 = arith.mulf %81, %53 : vector<16x32xf32>
    %92 = arith.addf %90, %91 : vector<16x32xf32>
    %93 = arith.index_cast %c1_i32 : i32 to index
    %c0_34 = arith.constant 0 : index
    %c0_35 = arith.constant 0 : index
    %94 = vector.load %arg8[%93, %c0_34, %c0_35] : memref<4x16x32xf32, #tpu.memory_space<vmem>>, vector<1x16x32xf32>
    %95 = vector.shape_cast %94 : vector<1x16x32xf32> to vector<16x32xf32>
    %96 = vector.shape_cast %92 : vector<16x32xf32> to vector<1x16x32xf32>
    tpu.vector_store %arg8[%93, %c0_34, %c0_35], %96 {strides = array<i32>} : memref<4x16x32xf32, #tpu.memory_space<vmem>>, vector<1x16x32xf32>,
    %c2_i32 = arith.constant 2 : i32
    %c16_i32_36 = arith.constant 16 : i32
    %97 = arith.muli %c2_i32, %c16_i32_36 : i32
    %98 = tpu.assume_multiple %97, 16 : i32
    %99 = arith.index_cast %98 : i32 to index
    %c0_37 = arith.constant 0 : index
    %100 = vector.load %arg9[%99, %c0_37] : memref<64x128xbf16, #tpu.memory_space<vmem>>, vector<16x128xbf16>
    %101 = arith.extf %100 : vector<16x128xbf16> to vector<16x128xf32>
    %102 = arith.truncf %92 : vector<16x32xf32> to vector<16x32xbf16>
    %c0_38 = arith.constant 0 : index
    %c0_39 = arith.constant 0 : index
    %103 = vector.load %arg6[%c0_38, %c0_39] : memref<32x128xbf16, #tpu.memory_space<vmem>>, vector<32x128xbf16>
    %cst_40 = arith.constant dense<0.000000e+00> : vector<16x128xf32>
    %104 = tpu.matmul %102, %103, %cst_40 {dimension_numbers = #tpu.dot_dimension_numbers<[1], [0], [0], [1], [0, 0, 1, 1], [], []>} : vector<16x32xbf16>, vector<32x128xbf16>, vector<16x128xf32> -> vector<16x128xf32>
    %105 = vector.extract_strided_slice %101 {offsets = [0, 0], sizes = [16, 32], strides = [1, 1]} : vector<16x128xf32> to vector<16x32xf32>
    %106 = vector.extract_strided_slice %104 {offsets = [0, 0], sizes = [16, 32], strides = [1, 1]} : vector<16x128xf32> to vector<16x32xf32>
    %107 = arith.addf %105, %106 : vector<16x32xf32>
    %108 = arith.negf %107 : vector<16x32xf32>
    %109 = math.exp %108 : vector<16x32xf32>
    %cst_41 = arith.constant 1.000000e+00 : f32
    %110 = vector.broadcast %cst_41 : f32 to vector<16x32xf32>
    %111 = arith.addf %110, %109 : vector<16x32xf32>
    %112 = arith.divf %110, %111 : vector<16x32xf32>
    %113 = vector.extract_strided_slice %101 {offsets = [0, 32], sizes = [16, 32], strides = [1, 1]} : vector<16x128xf32> to vector<16x32xf32>
    %114 = vector.extract_strided_slice %104 {offsets = [0, 32], sizes = [16, 32], strides = [1, 1]} : vector<16x128xf32> to vector<16x32xf32>
    %115 = arith.addf %113, %114 : vector<16x32xf32>
    %116 = arith.negf %115 : vector<16x32xf32>
    %117 = math.exp %116 : vector<16x32xf32>
    %cst_42 = arith.constant 1.000000e+00 : f32
    %118 = vector.broadcast %cst_42 : f32 to vector<16x32xf32>
    %119 = arith.addf %118, %117 : vector<16x32xf32>
    %120 = arith.divf %118, %119 : vector<16x32xf32>
    %121 = vector.extract_strided_slice %101 {offsets = [0, 64], sizes = [16, 32], strides = [1, 1]} : vector<16x128xf32> to vector<16x32xf32>
    %122 = vector.extract_strided_slice %104 {offsets = [0, 64], sizes = [16, 32], strides = [1, 1]} : vector<16x128xf32> to vector<16x32xf32>
    %123 = arith.addf %122, %17 : vector<16x32xf32>
    %124 = arith.mulf %112, %123 : vector<16x32xf32>
    %125 = arith.addf %121, %124 : vector<16x32xf32>
    %126 = math.tanh %125 : vector<16x32xf32>
    %cst_43 = arith.constant 1.000000e+00 : f32
    %127 = vector.broadcast %cst_43 : f32 to vector<16x32xf32>
    %128 = arith.subf %127, %120 : vector<16x32xf32>
    %129 = arith.mulf %128, %126 : vector<16x32xf32>
    %130 = arith.mulf %120, %92 : vector<16x32xf32>
    %131 = arith.addf %129, %130 : vector<16x32xf32>
    %132 = arith.index_cast %c2_i32 : i32 to index
    %c0_44 = arith.constant 0 : index
    %c0_45 = arith.constant 0 : index
    %133 = vector.load %arg8[%132, %c0_44, %c0_45] : memref<4x16x32xf32, #tpu.memory_space<vmem>>, vector<1x16x32xf32>
    %134 = vector.shape_cast %133 : vector<1x16x32xf32> to vector<16x32xf32>
    %135 = vector.shape_cast %131 : vector<16x32xf32> to vector<1x16x32xf32>
    tpu.vector_store %arg8[%132, %c0_44, %c0_45], %135 {strides = array<i32>} : memref<4x16x32xf32, #tpu.memory_space<vmem>>, vector<1x16x32xf32>,
    %c3_i32 = arith.constant 3 : i32
    %c16_i32_46 = arith.constant 16 : i32
    %136 = arith.muli %c3_i32, %c16_i32_46 : i32
    %137 = tpu.assume_multiple %136, 16 : i32
    %138 = arith.index_cast %137 : i32 to index
    %c0_47 = arith.constant 0 : index
    %139 = vector.load %arg9[%138, %c0_47] : memref<64x128xbf16, #tpu.memory_space<vmem>>, vector<16x128xbf16>
    %140 = arith.extf %139 : vector<16x128xbf16> to vector<16x128xf32>
    %141 = arith.truncf %131 : vector<16x32xf32> to vector<16x32xbf16>
    %c0_48 = arith.constant 0 : index
    %c0_49 = arith.constant 0 : index
    %142 = vector.load %arg6[%c0_48, %c0_49] : memref<32x128xbf16, #tpu.memory_space<vmem>>, vector<32x128xbf16>
    %cst_50 = arith.constant dense<0.000000e+00> : vector<16x128xf32>
    %143 = tpu.matmul %141, %142, %cst_50 {dimension_numbers = #tpu.dot_dimension_numbers<[1], [0], [0], [1], [0, 0, 1, 1], [], []>} : vector<16x32xbf16>, vector<32x128xbf16>, vector<16x128xf32> -> vector<16x128xf32>
    %144 = vector.extract_strided_slice %140 {offsets = [0, 0], sizes = [16, 32], strides = [1, 1]} : vector<16x128xf32> to vector<16x32xf32>
    %145 = vector.extract_strided_slice %143 {offsets = [0, 0], sizes = [16, 32], strides = [1, 1]} : vector<16x128xf32> to vector<16x32xf32>
    %146 = arith.addf %144, %145 : vector<16x32xf32>
    %147 = arith.negf %146 : vector<16x32xf32>
    %148 = math.exp %147 : vector<16x32xf32>
    %cst_51 = arith.constant 1.000000e+00 : f32
    %149 = vector.broadcast %cst_51 : f32 to vector<16x32xf32>
    %150 = arith.addf %149, %148 : vector<16x32xf32>
    %151 = arith.divf %149, %150 : vector<16x32xf32>
    %152 = vector.extract_strided_slice %140 {offsets = [0, 32], sizes = [16, 32], strides = [1, 1]} : vector<16x128xf32> to vector<16x32xf32>
    %153 = vector.extract_strided_slice %143 {offsets = [0, 32], sizes = [16, 32], strides = [1, 1]} : vector<16x128xf32> to vector<16x32xf32>
    %154 = arith.addf %152, %153 : vector<16x32xf32>
    %155 = arith.negf %154 : vector<16x32xf32>
    %156 = math.exp %155 : vector<16x32xf32>
    %cst_52 = arith.constant 1.000000e+00 : f32
    %157 = vector.broadcast %cst_52 : f32 to vector<16x32xf32>
    %158 = arith.addf %157, %156 : vector<16x32xf32>
    %159 = arith.divf %157, %158 : vector<16x32xf32>
    %160 = vector.extract_strided_slice %140 {offsets = [0, 64], sizes = [16, 32], strides = [1, 1]} : vector<16x128xf32> to vector<16x32xf32>
    %161 = vector.extract_strided_slice %143 {offsets = [0, 64], sizes = [16, 32], strides = [1, 1]} : vector<16x128xf32> to vector<16x32xf32>
    %162 = arith.addf %161, %17 : vector<16x32xf32>
    %163 = arith.mulf %151, %162 : vector<16x32xf32>
    %164 = arith.addf %160, %163 : vector<16x32xf32>
    %165 = math.tanh %164 : vector<16x32xf32>
    %cst_53 = arith.constant 1.000000e+00 : f32
    %166 = vector.broadcast %cst_53 : f32 to vector<16x32xf32>
    %167 = arith.subf %166, %159 : vector<16x32xf32>
    %168 = arith.mulf %167, %165 : vector<16x32xf32>
    %169 = arith.mulf %159, %131 : vector<16x32xf32>
    %170 = arith.addf %168, %169 : vector<16x32xf32>
    %171 = arith.index_cast %c3_i32 : i32 to index
    %c0_54 = arith.constant 0 : index
    %c0_55 = arith.constant 0 : index
    %172 = vector.load %arg8[%171, %c0_54, %c0_55] : memref<4x16x32xf32, #tpu.memory_space<vmem>>, vector<1x16x32xf32>
    %173 = vector.shape_cast %172 : vector<1x16x32xf32> to vector<16x32xf32>
    %174 = vector.shape_cast %170 : vector<16x32xf32> to vector<1x16x32xf32>
    tpu.vector_store %arg8[%171, %c0_54, %c0_55], %174 {strides = array<i32>} : memref<4x16x32xf32, #tpu.memory_space<vmem>>, vector<1x16x32xf32>,
    %c4_i32 = arith.constant 4 : i32
    %c0_56 = arith.constant 0 : index
    %c0_57 = arith.constant 0 : index
    %175 = vector.load %arg10[%c0_56, %c0_57] : memref<16x32xf32, #tpu.memory_space<vmem>>, vector<16x32xf32>
    tpu.vector_store %arg10[%c0_56, %c0_57], %170 {strides = array<i32>} : memref<16x32xf32, #tpu.memory_space<vmem>>, vector<16x32xf32>,
    return
  }
  func.func @transform_0(%arg0: i32, %arg1: i32) -> (i32, i32, i32) {
    %c0_i32 = arith.constant 0 : i32
    %c0_i32_0 = arith.constant 0 : i32
    return %arg1, %arg0, %c0_i32 : i32, i32, i32
  }
  func.func @transform_1(%arg0: i32, %arg1: i32) -> (i32, i32, i32) {
    %c0_i32 = arith.constant 0 : i32
    %c0_i32_0 = arith.constant 0 : i32
    return %arg1, %arg0, %c0_i32 : i32, i32, i32
  }
  func.func @transform_2(%arg0: i32, %arg1: i32) -> (i32, i32) {
    %c0_i32 = arith.constant 0 : i32
    %c0_i32_0 = arith.constant 0 : i32
    %c0_i32_1 = arith.constant 0 : i32
    return %c0_i32, %c0_i32_0 : i32, i32
  }
  func.func @transform_3(%arg0: i32, %arg1: i32) -> (i32, i32) {
    %c0_i32 = arith.constant 0 : i32
    %c0_i32_0 = arith.constant 0 : i32
    %c0_i32_1 = arith.constant 0 : i32
    return %c0_i32, %c0_i32_0 : i32, i32
  }
  func.func @transform_4(%arg0: i32, %arg1: i32) -> (i32, i32) {
    %c0_i32 = arith.constant 0 : i32
    %c0_i32_0 = arith.constant 0 : i32
    %c0_i32_1 = arith.constant 0 : i32
    return %c0_i32, %c0_i32_0 : i32, i32
  }
  func.func @transform_5(%arg0: i32, %arg1: i32) -> (i32, i32) {
    %c0_i32 = arith.constant 0 : i32
    %c0_i32_0 = arith.constant 0 : i32
    %c0_i32_1 = arith.constant 0 : i32
    return %c0_i32, %c0_i32_0 : i32, i32
  }
  func.func @transform_6(%arg0: i32, %arg1: i32) -> (i32, i32, i32) {
    %c0_i32 = arith.constant 0 : i32
    %c0_i32_0 = arith.constant 0 : i32
    return %arg1, %arg0, %c0_i32 : i32, i32, i32
  }
}

</mosaic_0001>

<llo_original>
// kernel: tpu_custom_call.1
$region0: #{tpu_custom_call.1}
  #allocation0 [shape = 'u32[]', space=smem, size = 0x4, offset = 0x4, fixed_abs, tag = 'smem constant byte address 0x4 - core index']
  #allocation1 [shape = 'u32[144,128]{1,0:T(1,128)}', space=vmem, size = 0x12000, scoped, tag = 'internal scratch']
  #allocation2 [shape = 'bf16[64,128]{1,0:T(8,128)(2,1)}', space=vmem, size = 0x4000, scoped, tag = 'scratch operand']
  #allocation3 [shape = 'f32[16,32]{1,0:T(8,128)}', space=vmem, size = 0x2000, scoped, tag = 'scratch operand']
  %s0 = inlined_call_operand.hbm [shape: f32[8,16,32], index: 0, kind: input, shape index: {}]
  %s1 = inlined_call_operand.hbm [shape: f32[8,16,32], index: 1, kind: input, shape index: {}]
  %s2 = inlined_call_operand.hbm [shape: bf16[32,128], index: 2, kind: input, shape index: {}]
  %s3 = inlined_call_operand.vmem [shape: f32[1,128], index: 3, kind: input, shape index: {}]
  %s4 = inlined_call_operand.hbm [shape: bf16[32,128], index: 4, kind: input, shape index: {}]
  %s5 = inlined_call_operand.vmem [shape: f32[1,32], index: 5, kind: input, shape index: {}]
  %s6 = inlined_call_operand.hbm [shape: f32[8,16,32], index: 6, kind: output, shape index: {}]
  %s7 = sld [smem:[#allocation0]]
  $region77: #{tpu_custom_call.1} parent=0
    _
  %s9 = ssub.s32 1, %s7
  %s10 = scalar_select 0, %s9, %s7
  $region1: #{tpu_custom_call.1} parent=0
    #allocation4 [shape = 'u8[65536]{0}', space=vmem, size = 0x10000, scoped, tag = 'input window, operand 0']
    #allocation5 [shape = 's32[2]{0}', space=sflag, size = 0x8, scoped, tag = 'scoped memory for tpu_custom_call.1']
    #allocation6 [shape = 's32[2]{0}', space=sflag, size = 0x8, scoped, tag = 'scoped memory for tpu_custom_call.1']
    #allocation7 [shape = 'u8[65536]{0}', space=vmem, size = 0x10000, scoped, tag = 'input window, operand 1']
    #allocation8 [shape = 's32[2]{0}', space=sflag, size = 0x8, scoped, tag = 'scoped memory for tpu_custom_call.1']
    #allocation9 [shape = 'u8[8192]{0}', space=vmem, size = 0x2000, scoped, tag = 'input window, operand 2, single buffered']
    #allocation10 [shape = 'u8[8192]{0}', space=vmem, size = 0x2000, scoped, tag = 'input window, operand 4, single buffered']
    #allocation11 [shape = 's32[1]{0}', space=sflag, size = 0x4, scoped, tag = 'scoped memory for tpu_custom_call.1']
    #allocation12 [shape = 'u8[65536]{0}', space=vmem, size = 0x10000, scoped, tag = 'output window, operand 0']
    %11 = vsyncpa [#allocation5], 0
    %s12 = scalar_lea.sflag [#allocation5], 1
    %13 = vsyncpa %s12, 0
    %14 = vsyncpa [#allocation8], 0
    %s15 = scalar_lea.sflag [#allocation8], 1
    %16 = vsyncpa %s15, 0
    %17 = vsyncpa [#allocation11], 0
    %18 = vsyncpa [#allocation6], 0
    %s19 = scalar_lea.sflag [#allocation6], 1
    %20 = vsyncpa %s19, 0
    loop: start=0, step=1, limit=4
    $region2: #{tpu_custom_call.1} parent=1 // loop_pre_header
      _
    $region3: #{tpu_custom_call.1} parent=1 // loop_header
      %s22 = sphi 0, %s26
      %p23 = scmp.ge.s32.totalorder %s22, 4
      %s29 = sphi 0, %s41
      %s30 = sphi 0, %s37
      %s31 = sphi 0, %s29
      %s32 = sphi 0, %s30
      %s33 = sphi 0, %s31
      %s34 = sphi 0, %s32
      %s46 = sphi 0, %s48
      %s49 = sphi 0, %s46
      %s50 = sphi 0, %s49
      %s66 = sphi 0, %s50
      %s74 = sphi 0, %s76
      %s77 = sphi 0, %s74
      %s78 = sphi 0, %s77
      %s94 = sphi 0, %s78
      %s98 = sphi 0, %s98
      %s100 = sphi 0, %s98
      %s101 = sphi 0, %s100
      %s115 = sphi 0, %s101
      %s119 = sphi 0, %s119
      %s121 = sphi 0, %s119
      %s122 = sphi 0, %s121
      %s136 = sphi 0, %s122
      %s140 = sphi 0, %s140
      %s142 = sphi 0, %s140
      %s143 = sphi 0, %s142
      %s157 = sphi 0, %s143
      %s161 = sphi 0, %s161
      %s163 = sphi 0, %s161
      %s164 = sphi 0, %s163
      %s178 = sphi 0, %s164
      %s186 = sphi 0, %s188
      %s189 = sphi 0, %s186
      %s190 = sphi 0, %s189
      %s206 = sphi 0, %s190
    $region4: #{tpu_custom_call.1} parent=1 // loop_header_branch
      %25 = sbr.rel (%p23) target = $region8
    $region5: #{tpu_custom_call.1} parent=1 // loop_body
      %s27 = ssub.s32 %s22, 1
      %s28 = ssub.s32 %s22, 2
      %s35 = sadd.s32 1, %s30
      %p36 = scmp.ge.s32.totalorder %s35, 2
      %s37 = scalar_select %p36, 0, %s35
      %s38 = sadd.s32 1, %s29
      %s39 = scalar_select %p36, %s38, %s29
      %p40 = scmp.ge.s32.totalorder %s39, 1
      %s41 = scalar_select %p40, 0, %s39
      %s42 = ssub.s32 %s30, %s37
      %s43 = ssub.s32 %s29, %s41
      %s44 = sor.u32 %s42, %s43
      %p45 = scmp.eq.s32.totalorder %s44, 0
      %s47 = sadd.s32 %s46, 1
      %s48 = scalar_select %p45, %s46, %s47
      %p51 = pneg %p45
      %p52 = scmp.eq.s32.totalorder %s22, 1
      %p53 = por %p51, %p52
      %p54 = scmp.ne.s32.totalorder %s46, %s49
      %p55 = scmp.eq.s32.totalorder %s22, 0
      %p56 = por %p54, %p55
      %p57 = scmp.ne.s32.totalorder %s46, %s49
      %p58 = scmp.eq.s32.totalorder %s27, 1
      %p59 = por %p57, %p58
      %p60 = scmp.ne.s32.totalorder %s49, %s50
      %p61 = scmp.eq.s32.totalorder %s27, 0
      %p62 = por %p60, %p61
      %p63 = scmp.ne.s32.totalorder %s49, %s50
      %p64 = scmp.eq.s32.totalorder %s28, 1
      %p65 = por %p63, %p64
      %p67 = scmp.ne.s32.totalorder %s50, %s66
      %p68 = scmp.eq.s32.totalorder %s28, 0
      %p69 = por %p67, %p68
      %s70 = ssub.s32 %s30, %s37
      %s71 = ssub.s32 %s29, %s41
      %s72 = sor.u32 %s70, %s71
      %p73 = scmp.eq.s32.totalorder %s72, 0
      %s75 = sadd.s32 %s74, 1
      %s76 = scalar_select %p73, %s74, %s75
      %p79 = pneg %p73
      %p80 = scmp.eq.s32.totalorder %s22, 1
      %p81 = por %p79, %p80
      %p82 = scmp.ne.s32.totalorder %s74, %s77
      %p83 = scmp.eq.s32.totalorder %s22, 0
      %p84 = por %p82, %p83
      %p85 = scmp.ne.s32.totalorder %s74, %s77
      %p86 = scmp.eq.s32.totalorder %s27, 1
      %p87 = por %p85, %p86
      %p88 = scmp.ne.s32.totalorder %s77, %s78
      %p89 = scmp.eq.s32.totalorder %s27, 0
      %p90 = por %p88, %p89
      %p91 = scmp.ne.s32.totalorder %s77, %s78
      %p92 = scmp.eq.s32.totalorder %s28, 1
      %p93 = por %p91, %p92
      %p95 = scmp.ne.s32.totalorder %s78, %s94
      %p96 = scmp.eq.s32.totalorder %s28, 0
      %p97 = por %p95, %p96
      %s99 = sadd.s32 %s98, 1
      %p102 = scmp.eq.s32.totalorder %s22, 1
      %p103 = scmp.ne.s32.totalorder %s98, %s100
      %p104 = scmp.eq.s32.totalorder %s22, 0
      %p105 = por %p103, %p104
      %p106 = scmp.ne.s32.totalorder %s98, %s100
      %p107 = scmp.eq.s32.totalorder %s27, 1
      %p108 = por %p106, %p107
      %p109 = scmp.ne.s32.totalorder %s100, %s101
      %p110 = scmp.eq.s32.totalorder %s27, 0
      %p111 = por %p109, %p110
      %p112 = scmp.ne.s32.totalorder %s100, %s101
      %p113 = scmp.eq.s32.totalorder %s28, 1
      %p114 = por %p112, %p113
      %p116 = scmp.ne.s32.totalorder %s101, %s115
      %p117 = scmp.eq.s32.totalorder %s28, 0
      %p118 = por %p116, %p117
      %s120 = sadd.s32 %s119, 1
      %p123 = scmp.eq.s32.totalorder %s22, 1
      %p124 = scmp.ne.s32.totalorder %s119, %s121
      %p125 = scmp.eq.s32.totalorder %s22, 0
      %p126 = por %p124, %p125
      %p127 = scmp.ne.s32.totalorder %s119, %s121
      %p128 = scmp.eq.s32.totalorder %s27, 1
      %p129 = por %p127, %p128
      %p130 = scmp.ne.s32.totalorder %s121, %s122
      %p131 = scmp.eq.s32.totalorder %s27, 0
      %p132 = por %p130, %p131
      %p133 = scmp.ne.s32.totalorder %s121, %s122
      %p134 = scmp.eq.s32.totalorder %s28, 1
      %p135 = por %p133, %p134
      %p137 = scmp.ne.s32.totalorder %s122, %s136
      %p138 = scmp.eq.s32.totalorder %s28, 0
      %p139 = por %p137, %p138
      %s141 = sadd.s32 %s140, 1
      %p144 = scmp.eq.s32.totalorder %s22, 1
      %p145 = scmp.ne.s32.totalorder %s140, %s142
      %p146 = scmp.eq.s32.totalorder %s22, 0
      %p147 = por %p145, %p146
      %p148 = scmp.ne.s32.totalorder %s140, %s142
      %p149 = scmp.eq.s32.totalorder %s27, 1
      %p150 = por %p148, %p149
      %p151 = scmp.ne.s32.totalorder %s142, %s143
      %p152 = scmp.eq.s32.totalorder %s27, 0
      %p153 = por %p151, %p152
      %p154 = scmp.ne.s32.totalorder %s142, %s143
      %p155 = scmp.eq.s32.totalorder %s28, 1
      %p156 = por %p154, %p155
      %p158 = scmp.ne.s32.totalorder %s143, %s157
      %p159 = scmp.eq.s32.totalorder %s28, 0
      %p160 = por %p158, %p159
      %s162 = sadd.s32 %s161, 1
      %p165 = scmp.eq.s32.totalorder %s22, 1
      %p166 = scmp.ne.s32.totalorder %s161, %s163
      %p167 = scmp.eq.s32.totalorder %s22, 0
      %p168 = por %p166, %p167
      %p169 = scmp.ne.s32.totalorder %s161, %s163
      %p170 = scmp.eq.s32.totalorder %s27, 1
      %p171 = por %p169, %p170
      %p172 = scmp.ne.s32.totalorder %s163, %s164
      %p173 = scmp.eq.s32.totalorder %s27, 0
      %p174 = por %p172, %p173
      %p175 = scmp.ne.s32.totalorder %s163, %s164
      %p176 = scmp.eq.s32.totalorder %s28, 1
      %p177 = por %p175, %p176
      %p179 = scmp.ne.s32.totalorder %s164, %s178
      %p180 = scmp.eq.s32.totalorder %s28, 0
      %p181 = por %p179, %p180
      %s182 = ssub.s32 %s30, %s37
      %s183 = ssub.s32 %s29, %s41
      %s184 = sor.u32 %s182, %s183
      %p185 = scmp.eq.s32.totalorder %s184, 0
      %s187 = sadd.s32 %s186, 1
      %s188 = scalar_select %p185, %s186, %s187
      %p191 = pneg %p185
      %p192 = scmp.eq.s32.totalorder %s22, 1
      %p193 = por %p191, %p192
      %p194 = scmp.ne.s32.totalorder %s186, %s189
      %p195 = scmp.eq.s32.totalorder %s22, 0
      %p196 = por %p194, %p195
      %p197 = scmp.ne.s32.totalorder %s186, %s189
      %p198 = scmp.eq.s32.totalorder %s27, 1
      %p199 = por %p197, %p198
      %p200 = scmp.ne.s32.totalorder %s189, %s190
      %p201 = scmp.eq.s32.totalorder %s27, 0
      %p202 = por %p200, %p201
      %p203 = scmp.ne.s32.totalorder %s189, %s190
      %p204 = scmp.eq.s32.totalorder %s28, 1
      %p205 = por %p203, %p204
      %p207 = scmp.ne.s32.totalorder %s190, %s206
      %p208 = scmp.eq.s32.totalorder %s28, 0
      %p209 = por %p207, %p208
      %p210 = scmp.le.s32.totalorder 1, %s22
      %p211 = scmp.lt.s32.totalorder %s22, 3
      %p212 = pnand %p210, %p211
      %p213 = pneg %p212
      // Predicated region
      $region9: #{tpu_custom_call.1} parent=5 // pred_check
        _
      $region10: #{tpu_custom_call.1} parent=5 // pred_check_branch
        %215 = sbr.rel (%p212) target = $region12
      $region11: #{tpu_custom_call.1} parent=5 // pred_region
        %s216 = ssub.s32 %s22, 1
        // Predicated region
        $region13: #{tpu_custom_call.1} parent=11 // pred_check
          %p217 = pneg %p111
        $region14: #{tpu_custom_call.1} parent=11 // pred_check_branch
          %219 = sbr.rel (%p217) target = $region16
        $region15: #{tpu_custom_call.1} parent=11 // pred_region
          %s221 = ssub.s32 256, 256
          %222 = vsyncadd [#allocation8], %s221
          %s223 = sshll.u32 [#allocation9], 4
          %s224 = int_to_ptr.vmem [resolvable:$true] %s223
          %229 = dma.hbm_to_vmem [thread:$0]  %s2, 256, %s224, [#allocation8], 64, 64, 4
        $region16: #{tpu_custom_call.1} parent=11 // pred_fallthru
          _
        // Predicated region
        $region17: #{tpu_custom_call.1} parent=11 // pred_check
          %p230 = pneg %p132
        $region18: #{tpu_custom_call.1} parent=11 // pred_check_branch
          %232 = sbr.rel (%p230) target = $region20
        $region19: #{tpu_custom_call.1} parent=11 // pred_region
          _
        $region20: #{tpu_custom_call.1} parent=11 // pred_fallthru
          _
        // Predicated region
        $region21: #{tpu_custom_call.1} parent=11 // pred_check
          %p233 = pneg %p153
        $region22: #{tpu_custom_call.1} parent=11 // pred_check_branch
          %235 = sbr.rel (%p233) target = $region24
        $region23: #{tpu_custom_call.1} parent=11 // pred_region
          %s237 = ssub.s32 256, 256
          %238 = vsyncadd [#allocation11], %s237
          %s239 = sshll.u32 [#allocation10], 4
          %s240 = int_to_ptr.vmem [resolvable:$true] %s239
          %245 = dma.hbm_to_vmem [thread:$0]  %s4, 256, %s240, [#allocation11], 64, 64, 4
        $region24: #{tpu_custom_call.1} parent=11 // pred_fallthru
          _
        // Predicated region
        $region25: #{tpu_custom_call.1} parent=11 // pred_check
          %p246 = pneg %p174
        $region26: #{tpu_custom_call.1} parent=11 // pred_check_branch
          %248 = sbr.rel (%p246) target = $region28
        $region27: #{tpu_custom_call.1} parent=11 // pred_region
          _
        $region28: #{tpu_custom_call.1} parent=11 // pred_fallthru
          _
      $region12: #{tpu_custom_call.1} parent=5 // pred_fallthru
        _
      %p249 = scmp.lt.s32.totalorder %s22, 2
      // Predicated region
      $region29: #{tpu_custom_call.1} parent=5 // pred_check
        %p250 = pneg %p249
      $region30: #{tpu_custom_call.1} parent=5 // pred_check_branch
        %252 = sbr.rel (%p250) target = $region32
      $region31: #{tpu_custom_call.1} parent=5 // pred_region
        // Predicated region
        $region33: #{tpu_custom_call.1} parent=31 // pred_check
          %p253 = pneg %p56
        $region34: #{tpu_custom_call.1} parent=31 // pred_check_branch
          %255 = sbr.rel (%p253) target = $region36
        $region35: #{tpu_custom_call.1} parent=31 // pred_region
          %s256 = sand.u32 %s46, 1
          %s257 = scalar_lea.sflag [#allocation5], %s256
          %s258 = sand.u32 %s46, 1
          %s259 = smul.addr %s258, 64
          %s260 = scalar_lea.vmem [#allocation4], %s259
          %s261 = smul.u32 4, %s30
          %s262 = smul.u32 2, %s29
          %s264 = ssub.s32 1024, 1024
          %265 = vsyncadd %s257, %s264
          %s266 = smul.addr %s261, 2
          %s267 = sadd.s32 %s262, %s266
          %s268 = smul.addr %s267, 128
          %s269 = scalar_lea.hbm %s0, %s268
          %s270 = sshll.u32 %s260, 4
          %s271 = int_to_ptr.vmem [resolvable:$true] %s270
          %276 = dma.hbm_to_vmem [thread:$0]  %s269, 1024, %s271, %s257, 128, 128, 8
        $region36: #{tpu_custom_call.1} parent=31 // pred_fallthru
          _
        // Predicated region
        $region37: #{tpu_custom_call.1} parent=31 // pred_check
          %p277 = pneg %p84
        $region38: #{tpu_custom_call.1} parent=31 // pred_check_branch
          %279 = sbr.rel (%p277) target = $region40
        $region39: #{tpu_custom_call.1} parent=31 // pred_region
          %s280 = sand.u32 %s22, 1
          %s281 = scalar_lea.sflag [#allocation8], %s280
          %s282 = sand.u32 %s74, 1
          %s283 = smul.addr %s282, 64
          %s284 = scalar_lea.vmem [#allocation7], %s283
          %s285 = smul.u32 4, %s30
          %s286 = smul.u32 2, %s29
          %s288 = ssub.s32 1024, 1024
          %289 = vsyncadd %s281, %s288
          %s290 = smul.addr %s285, 2
          %s291 = sadd.s32 %s286, %s290
          %s292 = smul.addr %s291, 128
          %s293 = scalar_lea.hbm %s1, %s292
          %s294 = sshll.u32 %s284, 4
          %s295 = int_to_ptr.vmem [resolvable:$true] %s294
          %300 = dma.hbm_to_vmem [thread:$0]  %s293, 1024, %s295, %s281, 128, 128, 8
        $region40: #{tpu_custom_call.1} parent=31 // pred_fallthru
          _
      $region32: #{tpu_custom_call.1} parent=5 // pred_fallthru
        _
      %p301 = scmp.le.s32.totalorder 1, %s22
      %p302 = scmp.lt.s32.totalorder %s22, 3
      %p303 = pnand %p301, %p302
      %p304 = pneg %p303
      // Predicated region
      $region41: #{tpu_custom_call.1} parent=5 // pred_check
        _
      $region42: #{tpu_custom_call.1} parent=5 // pred_check_branch
        %306 = sbr.rel (%p303) target = $region44
      $region43: #{tpu_custom_call.1} parent=5 // pred_region
        %s307 = ssub.s32 %s22, 1
        %s308 = sand.u32 %s49, 1
        %s309 = scalar_lea.sflag [#allocation5], %s308
        %s310 = sand.u32 %s49, 1
        %s311 = smul.addr %s310, 64
        %s312 = scalar_lea.vmem [#allocation4], %s311
        // Predicated region
        $region45: #{tpu_custom_call.1} parent=43 // pred_check
          %p313 = pneg %p62
        $region46: #{tpu_custom_call.1} parent=43 // pred_check_branch
          %315 = sbr.rel (%p313) target = $region48
        $region47: #{tpu_custom_call.1} parent=43 // pred_region
          %316 = dma.done %s309, 1024
        $region48: #{tpu_custom_call.1} parent=43 // pred_fallthru
          _
        %s317 = sand.u32 %s27, 1
        %s318 = scalar_lea.sflag [#allocation8], %s317
        %s319 = sand.u32 %s77, 1
        %s320 = smul.addr %s319, 64
        %s321 = scalar_lea.vmem [#allocation7], %s320
        // Predicated region
        $region49: #{tpu_custom_call.1} parent=43 // pred_check
          %p322 = pneg %p90
        $region50: #{tpu_custom_call.1} parent=43 // pred_check_branch
          %324 = sbr.rel (%p322) target = $region52
        $region51: #{tpu_custom_call.1} parent=43 // pred_region
          %325 = dma.done %s318, 1024
        $region52: #{tpu_custom_call.1} parent=43 // pred_fallthru
          _
        // Predicated region
        $region53: #{tpu_custom_call.1} parent=43 // pred_check
          %p326 = pneg %p111
        $region54: #{tpu_custom_call.1} parent=43 // pred_check_branch
          %328 = sbr.rel (%p326) target = $region56
        $region55: #{tpu_custom_call.1} parent=43 // pred_region
          %329 = dma.done [#allocation8], 256
        $region56: #{tpu_custom_call.1} parent=43 // pred_fallthru
          _
        // Predicated region
        $region57: #{tpu_custom_call.1} parent=43 // pred_check
          %p330 = pneg %p153
        $region58: #{tpu_custom_call.1} parent=43 // pred_check_branch
          %332 = sbr.rel (%p330) target = $region60
        $region59: #{tpu_custom_call.1} parent=43 // pred_region
          %333 = dma.done [#allocation11], 256
        $region60: #{tpu_custom_call.1} parent=43 // pred_fallthru
          _
        %s334 = sand.u32 %s49, 1
        %s335 = scalar_lea.sflag [#allocation5], %s334
        %s336 = sand.u32 %s49, 1
        %s337 = smul.addr %s336, 64
        %s338 = scalar_lea.vmem [#allocation4], %s337
        %p339 = pneg %p62
        %p340 = pneg %p59
        %s341 = sand.u32 %s27, 1
        %s342 = scalar_lea.sflag [#allocation8], %s341
        %s343 = sand.u32 %s77, 1
        %s344 = smul.addr %s343, 64
        %s345 = scalar_lea.vmem [#allocation7], %s344
        %p346 = pneg %p90
        %p347 = pneg %p87
        %p348 = pneg %p111
        %p349 = pneg %p108
        %p350 = pneg %p132
        %p351 = pneg %p129
        %p352 = pneg %p153
        %p353 = pneg %p150
        %p354 = pneg %p174
        %p355 = pneg %p171
        %p356 = pneg %p202
        %p357 = pneg %p199
        %s358 = sand.u32 %s189, 1
        %s359 = scalar_lea.sflag [#allocation6], %s358
        %s360 = sand.u32 %s189, 1
        %s361 = smul.addr %s360, 64
        %s362 = scalar_lea.vmem [#allocation12], %s361
        %s363 = smul.u32 4, %s32
        %s364 = smul.u32 2, %s31
        %s365 = smul.u32 4, %s32
        %s366 = smul.u32 2, %s31
        %s367 = smul.u32 4, %s32
        %s368 = smul.u32 2, %s31
        %p370 = scmp.eq.s32.totalorder %s32, 0
        // Predicated region
        $region61: #{tpu_custom_call.1} parent=43 // pred_check
          %p371 = pneg %p370
        $region62: #{tpu_custom_call.1} parent=43 // pred_check_branch
          %373 = sbr.rel (%p371) target = $region64
        $region63: #{tpu_custom_call.1} parent=43 // pred_region
          %vm374 = vcmask 261120
          %375 = vst.msk [vmem:[#allocation3] sm:$0xff] %vm374, 0.0
          %376 = vst.msk [vmem:[#allocation3 + $0x8] sm:$0xff] %vm374, 0.0
        $region64: #{tpu_custom_call.1} parent=43 // pred_fallthru
          _
        %v377 = vld [vmem:[%s312] sm:$0xff]
        %v378 = vld [vmem:[%s312 + $0x8] sm:$0xff]
        %v379 = vld [vmem:[%s312 + $0x10] sm:$0xff]
        %v380 = vld [vmem:[%s312 + $0x18] sm:$0xff]
        %v381 = vld [vmem:[%s312 + $0x20] sm:$0xff]
        %v382 = vld [vmem:[%s312 + $0x28] sm:$0xff]
        %v383 = vld [vmem:[%s312 + $0x30] sm:$0xff]
        %v384 = vld [vmem:[%s312 + $0x38] sm:$0xff]
        %v385 = vld [vmem:[%s321] sm:$0xff]
        %v386 = vld [vmem:[%s321 + $0x8] sm:$0xff]
        %v387 = vld [vmem:[%s321 + $0x10] sm:$0xff]
        %v388 = vld [vmem:[%s321 + $0x18] sm:$0xff]
        %v389 = vld [vmem:[%s321 + $0x20] sm:$0xff]
        %v390 = vld [vmem:[%s321 + $0x28] sm:$0xff]
        %v391 = vld [vmem:[%s321 + $0x30] sm:$0xff]
        %v392 = vld [vmem:[%s321 + $0x38] sm:$0xff]
        %v393 = vmul.f32 %v377, %v385
        %v394 = vmul.f32 %v378, %v386
        %v395 = vmul.f32 %v379, %v387
        %v396 = vmul.f32 %v380, %v388
        %v397 = vmul.f32 %v381, %v389
        %v398 = vmul.f32 %v382, %v390
        %v399 = vmul.f32 %v383, %v391
        %v400 = vmul.f32 %v384, %v392
        %v401 = vpack.c.bf16 %v394, %v393
        %v402 = vpack.c.bf16 %v396, %v395
        %v403 = vpack.c.bf16 %v398, %v397
        %v404 = vpack.c.bf16 %v400, %v399
        %v405 = vld [vmem:[#allocation9] sm:$0xf]
        %v406 = vld [vmem:[#allocation9 + $0x4] sm:$0xf]
        %v407 = vld [vmem:[#allocation9 + $0x8] sm:$0xf]
        %v408 = vld [vmem:[#allocation9 + $0xc] sm:$0xf]
        %v409 = vld [vmem:[%s3] sm:$0x1]
        %v411 = vlaneseq
        %v412 = vshrl.u32 %v411, 7
        %v413 = vsub.s32 0, %v412
        %v414 = vrot.slane %v409, %v413
        %v420 = vunpack.c.l.b16 %v405
        %v421 = vunpack.c.l.b16 %v406
        %v422 = vunpack.c.l.b16 %v407
        %v423 = vunpack.c.l.b16 %v408
        %v424 = vpack.c.b16 %v421, %v420
        %v425 = vpack.c.b16 %v423, %v422
        %vm428 = vcmask 261120
        %v430 = vsel %vm428, %v401, 0
        %v433 = vsel %vm428, %v402, 0
        %v436 = vsel %vm428, %v403, 0
        %v439 = vsel %vm428, %v404, 0
        %441 = vmatprep.subr.bf16.mxu0 0
        %442 = vmatpush1.bf16.msra.mxu0 0
        %443 = vmatprep.subr.bf16.mxu0 0
        %444 = vmatpush1.bf16.msra.mxu0 0
        %445 = vmatprep.subr.bf16.mxu0 0
        %446 = vmatpush1.bf16.msra.mxu0 0
        %447 = vmatprep.subr.bf16.mxu0 0
        %448 = vmatpush1.bf16.msra.mxu0 0
        %449 = vmatprep.subr.bf16.mxu0 0
        %450 = vmatpush1.bf16.msra.mxu0 0
        %451 = vmatprep.subr.bf16.mxu0 0
        %452 = vmatpush1.bf16.msra.mxu0 0
        %453 = vmatprep.subr.bf16.mxu0 0
        %454 = vmatpush1.bf16.msra.mxu0 %v425
        %455 = vmatprep.subr.bf16.mxu0 0
        %456 = vmatpush1.bf16.msra.mxu0 %v424
        %457 = vmatprep.subr.bf16.mxu0 0
        %458 = vmatpush2.bf16.msra.mxu0 0
        %459 = vmatprep.subr.bf16.mxu0 0
        %460 = vmatpush2.bf16.msra.mxu0 0
        %461 = vmatprep.subr.bf16.mxu0 0
        %462 = vmatpush2.bf16.msra.mxu0 0
        %463 = vmatprep.subr.bf16.mxu0 0
        %464 = vmatpush2.bf16.msra.mxu0 0
        %465 = vmatprep.subr.bf16.mxu0 0
        %466 = vmatpush2.bf16.msra.mxu0 0
        %467 = vmatprep.subr.bf16.mxu0 0
        %468 = vmatpush2.bf16.msra.mxu0 0
        %469 = vmatprep.subr.bf16.mxu0 0
        %470 = vmatpush2.bf16.msra.mxu0 0
        %471 = vmatprep.subr.bf16.mxu0 0
        %472 = vmatpush2.bf16.msra.mxu0 0
        %473 = vmatprep.mubr.bf16.mxu0 0
        %474 = vmatmul.mubr.bf16.gmra.mxu0 %v430
        %v475 = vpop.f32.mrf.mxu0
        %v476 = vadd.f32 %v414, %v475
        %v477 = vpop.f32.mrf.mxu0
        %v478 = vpop.f32.mrf.mxu0
        %v479 = vadd.f32 %v414, %v478
        %v480 = vpop.f32.mrf.mxu0
        %481 = vmatprep.mubr.bf16.mxu0 0
        %482 = vmatmul.mubr.bf16.gmra.mxu0 %v433
        %v483 = vpop.f32.mrf.mxu0
        %v484 = vadd.f32 %v414, %v483
        %v485 = vpop.f32.mrf.mxu0
        %v486 = vpop.f32.mrf.mxu0
        %v487 = vadd.f32 %v414, %v486
        %v488 = vpop.f32.mrf.mxu0
        %489 = vmatprep.mubr.bf16.mxu0 0
        %490 = vmatmul.mubr.bf16.gmra.mxu0 %v436
        %v491 = vpop.f32.mrf.mxu0
        %v492 = vadd.f32 %v414, %v491
        %v493 = vpop.f32.mrf.mxu0
        %v494 = vpop.f32.mrf.mxu0
        %v495 = vadd.f32 %v414, %v494
        %v496 = vpop.f32.mrf.mxu0
        %497 = vmatprep.mubr.bf16.mxu0 0
        %498 = vmatmul.mubr.bf16.gmra.mxu0 %v439
        %v499 = vpop.f32.mrf.mxu0
        %v500 = vadd.f32 %v414, %v499
        %v501 = vpop.f32.mrf.mxu0
        %v502 = vpop.f32.mrf.mxu0
        %v503 = vadd.f32 %v414, %v502
        %v504 = vpop.f32.mrf.mxu0
        %505 = vdwg.mxu0
        %v506 = vpack.c.bf16 %v479, %v476
        %v507 = vpack.c.bf16 %v487, %v484
        %v508 = vpack.c.bf16 %v495, %v492
        %v509 = vpack.c.bf16 %v503, %v500
        %v514 = vunpack.c.l.b16 %v506
        %v515 = vunpack.c.h.b16 %v506
        %v516 = vunpack.c.l.b16 %v507
        %v517 = vunpack.c.h.b16 %v507
        %v518 = vunpack.c.l.b16 %v508
        %v519 = vunpack.c.h.b16 %v508
        %v520 = vunpack.c.l.b16 %v509
        %v521 = vunpack.c.h.b16 %v509
        %v522 = vpack.c.b16 %v514, %v514
        %v523 = vpack.c.b16 %v515, %v515
        %v524 = vpack.c.b16 %v516, %v516
        %v525 = vpack.c.b16 %v517, %v517
        %v526 = vpack.c.b16 %v518, %v518
        %v527 = vpack.c.b16 %v519, %v519
        %v528 = vpack.c.b16 %v520, %v520
        %v529 = vpack.c.b16 %v521, %v521
        %538 = vst [vmem:[#allocation2] sm:$0xf] %v522
        %539 = vst [vmem:[#allocation2 + $0x4] sm:$0xf] %v523
        %540 = vst [vmem:[#allocation2 + $0x8] sm:$0xf] %v524
        %541 = vst [vmem:[#allocation2 + $0xc] sm:$0xf] %v525
        %542 = vst [vmem:[#allocation2 + $0x10] sm:$0xf] %v526
        %543 = vst [vmem:[#allocation2 + $0x14] sm:$0xf] %v527
        %544 = vst [vmem:[#allocation2 + $0x18] sm:$0xf] %v528
        %545 = vst [vmem:[#allocation2 + $0x1c] sm:$0xf] %v529
        %v546 = vld [vmem:[%s5] sm:$0x1]
        %v548 = vlaneseq
        %v549 = vshrl.u32 %v548, 7
        %v550 = vsub.s32 0, %v549
        %v551 = vrot.slane %v546, %v550
        %v552 = vld [vmem:[#allocation3] sm:$0xff]
        %v553 = vld [vmem:[#allocation3 + $0x8] sm:$0xff]
        %v554 = vld [vmem:[#allocation2] sm:$0xf]
        %v555 = vld [vmem:[#allocation2 + $0x4] sm:$0xf]
        %v556 = vunpack.c.l.bf16 %v554
        %v557 = vunpack.c.l.bf16 %v555
        %v558 = vpack.c.bf16 %v553, %v552
        %v559 = vld [vmem:[#allocation10] sm:$0xf]
        %v560 = vld [vmem:[#allocation10 + $0x4] sm:$0xf]
        %v561 = vld [vmem:[#allocation10 + $0x8] sm:$0xf]
        %v562 = vld [vmem:[#allocation10 + $0xc] sm:$0xf]
        %v567 = vunpack.c.l.b16 %v559
        %v568 = vunpack.c.l.b16 %v560
        %v569 = vunpack.c.l.b16 %v561
        %v570 = vunpack.c.l.b16 %v562
        %v571 = vpack.c.b16 %v568, %v567
        %v572 = vpack.c.b16 %v570, %v569
        %v576 = vsel %vm428, %v558, 0
        %578 = vmatprep.subr.bf16.mxu0 0
        %579 = vmatpush1.bf16.msra.mxu0 0
        %580 = vmatprep.subr.bf16.mxu0 0
        %581 = vmatpush1.bf16.msra.mxu0 0
        %582 = vmatprep.subr.bf16.mxu0 0
        %583 = vmatpush1.bf16.msra.mxu0 0
        %584 = vmatprep.subr.bf16.mxu0 0
        %585 = vmatpush1.bf16.msra.mxu0 0
        %586 = vmatprep.subr.bf16.mxu0 0
        %587 = vmatpush1.bf16.msra.mxu0 0
        %588 = vmatprep.subr.bf16.mxu0 0
        %589 = vmatpush1.bf16.msra.mxu0 0
        %590 = vmatprep.subr.bf16.mxu0 0
        %591 = vmatpush1.bf16.msra.mxu0 %v572
        %592 = vmatprep.subr.bf16.mxu0 0
        %593 = vmatpush1.bf16.msra.mxu0 %v571
        %594 = vmatprep.subr.bf16.mxu0 0
        %595 = vmatpush2.bf16.msra.mxu0 0
        %596 = vmatprep.subr.bf16.mxu0 0
        %597 = vmatpush2.bf16.msra.mxu0 0
        %598 = vmatprep.subr.bf16.mxu0 0
        %599 = vmatpush2.bf16.msra.mxu0 0
        %600 = vmatprep.subr.bf16.mxu0 0
        %601 = vmatpush2.bf16.msra.mxu0 0
        %602 = vmatprep.subr.bf16.mxu0 0
        %603 = vmatpush2.bf16.msra.mxu0 0
        %604 = vmatprep.subr.bf16.mxu0 0
        %605 = vmatpush2.bf16.msra.mxu0 0
        %606 = vmatprep.subr.bf16.mxu0 0
        %607 = vmatpush2.bf16.msra.mxu0 0
        %608 = vmatprep.subr.bf16.mxu0 0
        %609 = vmatpush2.bf16.msra.mxu0 0
        %610 = vmatprep.mubr.bf16.mxu0 0
        %611 = vmatmul.mubr.bf16.gmra.mxu0 %v576
        %v612 = vpop.f32.mrf.mxu0
        %v613 = vadd.f32 0.0, %v612
        %v614 = vpop.f32.mrf.mxu0
        %v615 = vpop.f32.mrf.mxu0
        %v616 = vadd.f32 0.0, %v615
        %v617 = vpop.f32.mrf.mxu0
        %618 = vdwg.mxu0
        %v619 = vadd.f32 %v556, %v613
        %v620 = vadd.f32 %v557, %v616
        %v621 = vxor.u32 %v619, 2147483648
        %v622 = vxor.u32 %v620, 2147483648
        %v623 = vmul.f32 %v621, 1.442695
        %v624 = vpow.pop %v623
        %v625 = vmul.f32 %v622, 1.442695
        %v626 = vpow.pop %v625
        %v627 = vadd.f32 %v624, 1.0
        %v628 = vadd.f32 %v626, 1.0
        %v629 = vrcp.pop %v627
        %v630 = vmul.f32 1.0, %v629
        %v631 = vrcp.pop %v628
        %v632 = vmul.f32 1.0, %v631
        %633 = vrot.lane.b32.xlu0 %v551, 64
        %v634 = vpop.permute.xlu0 %633
        %v636 = vadd.f32 %v613, %v634
        %v637 = vadd.f32 %v616, %v634
        %640 = vrot.lane.b32.xlu0 %v636, 64
        %v641 = vpop.permute.xlu0 %640
        %642 = vrot.lane.b32.xlu0 %v637, 64
        %v643 = vpop.permute.xlu0 %642
        %v646 = vmul.f32 %v630, %v641
        %v647 = vmul.f32 %v632, %v643
        %650 = vrot.lane.b32.xlu0 %v646, 64
        %v651 = vpop.permute.xlu0 %650
        %652 = vrot.lane.b32.xlu0 %v647, 64
        %v653 = vpop.permute.xlu0 %652
        %v656 = vadd.f32 %v556, %v651
        %v657 = vadd.f32 %v557, %v653
        %v658 = vtanh.pop %v656
        %v659 = vtanh.pop %v657
        %v660 = vsub.f32 1.0, %v630
        %v661 = vsub.f32 1.0, %v632
        %664 = vrot.lane.b32.xlu0 %v658, 96
        %v665 = vpop.permute.xlu0 %664
        %666 = vrot.lane.b32.xlu0 %v659, 96
        %v667 = vpop.permute.xlu0 %666
        %v670 = vmul.f32 %v660, %v665
        %v671 = vmul.f32 %v661, %v667
        %674 = vrot.lane.b32.xlu0 %v552, 32
        %v675 = vpop.permute.xlu0 %674
        %676 = vrot.lane.b32.xlu0 %v553, 32
        %v677 = vpop.permute.xlu0 %676
        %v680 = vmul.f32 %v630, %v675
        %v681 = vmul.f32 %v632, %v677
        %v682 = vadd.f32 %v670, %v680
        %v683 = vadd.f32 %v671, %v681
        %686 = vrot.lane.b32.xlu0 %v682, 96
        %v687 = vpop.permute.xlu0 %686
        %688 = vrot.lane.b32.xlu0 %v683, 96
        %v689 = vpop.permute.xlu0 %688
        %692 = vst.msk [vmem:[%s362] sm:$0xff] %vm428, %v687
        %693 = vst.msk [vmem:[%s362 + $0x8] sm:$0xff] %vm428, %v689
        %s694 = scalar_lea.vmem [#allocation2], 8
        %v695 = vld [vmem:[%s694] sm:$0xf]
        %v696 = vld [vmem:[%s694 + $0x4] sm:$0xf]
        %v697 = vunpack.c.l.bf16 %v695
        %v698 = vunpack.c.l.bf16 %v696
        %v699 = vpack.c.bf16 %v683, %v682
        %v700 = vld [vmem:[#allocation10] sm:$0xf]
        %v701 = vld [vmem:[#allocation10 + $0x4] sm:$0xf]
        %v702 = vld [vmem:[#allocation10 + $0x8] sm:$0xf]
        %v703 = vld [vmem:[#allocation10 + $0xc] sm:$0xf]
        %705 = vrot.lane.b32.xlu0 %v699, 96
        %v706 = vpop.permute.xlu0 %705
        %v711 = vunpack.c.l.b16 %v700
        %v712 = vunpack.c.l.b16 %v701
        %v713 = vunpack.c.l.b16 %v702
        %v714 = vunpack.c.l.b16 %v703
        %v715 = vpack.c.b16 %v712, %v711
        %v716 = vpack.c.b16 %v714, %v713
        %v720 = vsel %vm428, %v706, 0
        %722 = vmatprep.subr.bf16.mxu0 0
        %723 = vmatpush1.bf16.msra.mxu0 0
        %724 = vmatprep.subr.bf16.mxu0 0
        %725 = vmatpush1.bf16.msra.mxu0 0
        %726 = vmatprep.subr.bf16.mxu0 0
        %727 = vmatpush1.bf16.msra.mxu0 0
        %728 = vmatprep.subr.bf16.mxu0 0
        %729 = vmatpush1.bf16.msra.mxu0 0
        %730 = vmatprep.subr.bf16.mxu0 0
        %731 = vmatpush1.bf16.msra.mxu0 0
        %732 = vmatprep.subr.bf16.mxu0 0
        %733 = vmatpush1.bf16.msra.mxu0 0
        %734 = vmatprep.subr.bf16.mxu0 0
        %735 = vmatpush1.bf16.msra.mxu0 %v716
        %736 = vmatprep.subr.bf16.mxu0 0
        %737 = vmatpush1.bf16.msra.mxu0 %v715
        %738 = vmatprep.subr.bf16.mxu0 0
        %739 = vmatpush2.bf16.msra.mxu0 0
        %740 = vmatprep.subr.bf16.mxu0 0
        %741 = vmatpush2.bf16.msra.mxu0 0
        %742 = vmatprep.subr.bf16.mxu0 0
        %743 = vmatpush2.bf16.msra.mxu0 0
        %744 = vmatprep.subr.bf16.mxu0 0
        %745 = vmatpush2.bf16.msra.mxu0 0
        %746 = vmatprep.subr.bf16.mxu0 0
        %747 = vmatpush2.bf16.msra.mxu0 0
        %748 = vmatprep.subr.bf16.mxu0 0
        %749 = vmatpush2.bf16.msra.mxu0 0
        %750 = vmatprep.subr.bf16.mxu0 0
        %751 = vmatpush2.bf16.msra.mxu0 0
        %752 = vmatprep.subr.bf16.mxu0 0
        %753 = vmatpush2.bf16.msra.mxu0 0
        %754 = vmatprep.mubr.bf16.mxu0 0
        %755 = vmatmul.mubr.bf16.gmra.mxu0 %v720
        %v756 = vpop.f32.mrf.mxu0
        %v757 = vadd.f32 0.0, %v756
        %v758 = vpop.f32.mrf.mxu0
        %v759 = vpop.f32.mrf.mxu0
        %v760 = vadd.f32 0.0, %v759
        %v761 = vpop.f32.mrf.mxu0
        %762 = vdwg.mxu0
        %v763 = vadd.f32 %v697, %v757
        %v764 = vadd.f32 %v698, %v760
        %v765 = vxor.u32 %v763, 2147483648
        %v766 = vxor.u32 %v764, 2147483648
        %v767 = vmul.f32 %v765, 1.442695
        %v768 = vpow.pop %v767
        %v769 = vmul.f32 %v766, 1.442695
        %v770 = vpow.pop %v769
        %v771 = vadd.f32 %v768, 1.0
        %v772 = vadd.f32 %v770, 1.0
        %v773 = vrcp.pop %v771
        %v774 = vmul.f32 1.0, %v773
        %v775 = vrcp.pop %v772
        %v776 = vmul.f32 1.0, %v775
        %v777 = vadd.f32 %v757, %v634
        %v778 = vadd.f32 %v760, %v634
        %781 = vrot.lane.b32.xlu0 %v777, 64
        %v782 = vpop.permute.xlu0 %781
        %783 = vrot.lane.b32.xlu0 %v778, 64
        %v784 = vpop.permute.xlu0 %783
        %v787 = vmul.f32 %v774, %v782
        %v788 = vmul.f32 %v776, %v784
        %791 = vrot.lane.b32.xlu0 %v787, 64
        %v792 = vpop.permute.xlu0 %791
        %793 = vrot.lane.b32.xlu0 %v788, 64
        %v794 = vpop.permute.xlu0 %793
        %v797 = vadd.f32 %v697, %v792
        %v798 = vadd.f32 %v698, %v794
        %v799 = vtanh.pop %v797
        %v800 = vtanh.pop %v798
        %v801 = vsub.f32 1.0, %v774
        %v802 = vsub.f32 1.0, %v776
        %805 = vrot.lane.b32.xlu0 %v799, 96
        %v806 = vpop.permute.xlu0 %805
        %807 = vrot.lane.b32.xlu0 %v800, 96
        %v808 = vpop.permute.xlu0 %807
        %v811 = vmul.f32 %v801, %v806
        %v812 = vmul.f32 %v802, %v808
        %v813 = vmul.f32 %v774, %v682
        %v814 = vmul.f32 %v776, %v683
        %v815 = vadd.f32 %v811, %v813
        %v816 = vadd.f32 %v812, %v814
        %819 = vrot.lane.b32.xlu0 %v815, 96
        %v820 = vpop.permute.xlu0 %819
        %821 = vrot.lane.b32.xlu0 %v816, 96
        %v822 = vpop.permute.xlu0 %821
        %s825 = scalar_lea.vmem %s362, 16 [#allocation12]
        %826 = vst.msk [vmem:[%s825] sm:$0xff] %vm428, %v820
        %827 = vst.msk [vmem:[%s825 + $0x8] sm:$0xff] %vm428, %v822
        %s828 = scalar_lea.vmem [#allocation2], 16
        %v829 = vld [vmem:[%s828] sm:$0xf]
        %v830 = vld [vmem:[%s828 + $0x4] sm:$0xf]
        %v831 = vunpack.c.l.bf16 %v829
        %v832 = vunpack.c.l.bf16 %v830
        %v833 = vpack.c.bf16 %v816, %v815
        %v834 = vld [vmem:[#allocation10] sm:$0xf]
        %v835 = vld [vmem:[#allocation10 + $0x4] sm:$0xf]
        %v836 = vld [vmem:[#allocation10 + $0x8] sm:$0xf]
        %v837 = vld [vmem:[#allocation10 + $0xc] sm:$0xf]
        %839 = vrot.lane.b32.xlu0 %v833, 96
        %v840 = vpop.permute.xlu0 %839
        %v845 = vunpack.c.l.b16 %v834
        %v846 = vunpack.c.l.b16 %v835
        %v847 = vunpack.c.l.b16 %v836
        %v848 = vunpack.c.l.b16 %v837
        %v849 = vpack.c.b16 %v846, %v845
        %v850 = vpack.c.b16 %v848, %v847
        %v854 = vsel %vm428, %v840, 0
        %856 = vmatprep.subr.bf16.mxu0 0
        %857 = vmatpush1.bf16.msra.mxu0 0
        %858 = vmatprep.subr.bf16.mxu0 0
        %859 = vmatpush1.bf16.msra.mxu0 0
        %860 = vmatprep.subr.bf16.mxu0 0
        %861 = vmatpush1.bf16.msra.mxu0 0
        %862 = vmatprep.subr.bf16.mxu0 0
        %863 = vmatpush1.bf16.msra.mxu0 0
        %864 = vmatprep.subr.bf16.mxu0 0
        %865 = vmatpush1.bf16.msra.mxu0 0
        %866 = vmatprep.subr.bf16.mxu0 0
        %867 = vmatpush1.bf16.msra.mxu0 0
        %868 = vmatprep.subr.bf16.mxu0 0
        %869 = vmatpush1.bf16.msra.mxu0 %v850
        %870 = vmatprep.subr.bf16.mxu0 0
        %871 = vmatpush1.bf16.msra.mxu0 %v849
        %872 = vmatprep.subr.bf16.mxu0 0
        %873 = vmatpush2.bf16.msra.mxu0 0
        %874 = vmatprep.subr.bf16.mxu0 0
        %875 = vmatpush2.bf16.msra.mxu0 0
        %876 = vmatprep.subr.bf16.mxu0 0
        %877 = vmatpush2.bf16.msra.mxu0 0
        %878 = vmatprep.subr.bf16.mxu0 0
        %879 = vmatpush2.bf16.msra.mxu0 0
        %880 = vmatprep.subr.bf16.mxu0 0
        %881 = vmatpush2.bf16.msra.mxu0 0
        %882 = vmatprep.subr.bf16.mxu0 0
        %883 = vmatpush2.bf16.msra.mxu0 0
        %884 = vmatprep.subr.bf16.mxu0 0
        %885 = vmatpush2.bf16.msra.mxu0 0
        %886 = vmatprep.subr.bf16.mxu0 0
        %887 = vmatpush2.bf16.msra.mxu0 0
        %888 = vmatprep.mubr.bf16.mxu0 0
        %889 = vmatmul.mubr.bf16.gmra.mxu0 %v854
        %v890 = vpop.f32.mrf.mxu0
        %v891 = vadd.f32 0.0, %v890
        %v892 = vpop.f32.mrf.mxu0
        %v893 = vpop.f32.mrf.mxu0
        %v894 = vadd.f32 0.0, %v893
        %v895 = vpop.f32.mrf.mxu0
        %896 = vdwg.mxu0
        %v897 = vadd.f32 %v831, %v891
        %v898 = vadd.f32 %v832, %v894
        %v899 = vxor.u32 %v897, 2147483648
        %v900 = vxor.u32 %v898, 2147483648
        %v901 = vmul.f32 %v899, 1.442695
        %v902 = vpow.pop %v901
        %v903 = vmul.f32 %v900, 1.442695
        %v904 = vpow.pop %v903
        %v905 = vadd.f32 %v902, 1.0
        %v906 = vadd.f32 %v904, 1.0
        %v907 = vrcp.pop %v905
        %v908 = vmul.f32 1.0, %v907
        %v909 = vrcp.pop %v906
        %v910 = vmul.f32 1.0, %v909
        %v911 = vadd.f32 %v891, %v634
        %v912 = vadd.f32 %v894, %v634
        %915 = vrot.lane.b32.xlu0 %v911, 64
        %v916 = vpop.permute.xlu0 %915
        %917 = vrot.lane.b32.xlu0 %v912, 64
        %v918 = vpop.permute.xlu0 %917
        %v921 = vmul.f32 %v908, %v916
        %v922 = vmul.f32 %v910, %v918
        %925 = vrot.lane.b32.xlu0 %v921, 64
        %v926 = vpop.permute.xlu0 %925
        %927 = vrot.lane.b32.xlu0 %v922, 64
        %v928 = vpop.permute.xlu0 %927
        %v931 = vadd.f32 %v831, %v926
        %v932 = vadd.f32 %v832, %v928
        %v933 = vtanh.pop %v931
        %v934 = vtanh.pop %v932
        %v935 = vsub.f32 1.0, %v908
        %v936 = vsub.f32 1.0, %v910
        %939 = vrot.lane.b32.xlu0 %v933, 96
        %v940 = vpop.permute.xlu0 %939
        %941 = vrot.lane.b32.xlu0 %v934, 96
        %v942 = vpop.permute.xlu0 %941
        %v945 = vmul.f32 %v935, %v940
        %v946 = vmul.f32 %v936, %v942
        %v947 = vmul.f32 %v908, %v815
        %v948 = vmul.f32 %v910, %v816
        %v949 = vadd.f32 %v945, %v947
        %v950 = vadd.f32 %v946, %v948
        %953 = vrot.lane.b32.xlu0 %v949, 96
        %v954 = vpop.permute.xlu0 %953
        %955 = vrot.lane.b32.xlu0 %v950, 96
        %v956 = vpop.permute.xlu0 %955
        %s959 = scalar_lea.vmem %s362, 32 [#allocation12]
        %960 = vst.msk [vmem:[%s959] sm:$0xff] %vm428, %v954
        %961 = vst.msk [vmem:[%s959 + $0x8] sm:$0xff] %vm428, %v956
        %s962 = scalar_lea.vmem [#allocation2], 24
        %v963 = vld [vmem:[%s962] sm:$0xf]
        %v964 = vld [vmem:[%s962 + $0x4] sm:$0xf]
        %v965 = vunpack.c.l.bf16 %v963
        %v966 = vunpack.c.l.bf16 %v964
        %v967 = vpack.c.bf16 %v950, %v949
        %v968 = vld [vmem:[#allocation10] sm:$0xf]
        %v969 = vld [vmem:[#allocation10 + $0x4] sm:$0xf]
        %v970 = vld [vmem:[#allocation10 + $0x8] sm:$0xf]
        %v971 = vld [vmem:[#allocation10 + $0xc] sm:$0xf]
        %973 = vrot.lane.b32.xlu0 %v967, 96
        %v974 = vpop.permute.xlu0 %973
        %v979 = vunpack.c.l.b16 %v968
        %v980 = vunpack.c.l.b16 %v969
        %v981 = vunpack.c.l.b16 %v970
        %v982 = vunpack.c.l.b16 %v971
        %v983 = vpack.c.b16 %v980, %v979
        %v984 = vpack.c.b16 %v982, %v981
        %v988 = vsel %vm428, %v974, 0
        %990 = vmatprep.subr.bf16.mxu0 0
        %991 = vmatpush1.bf16.msra.mxu0 0
        %992 = vmatprep.subr.bf16.mxu0 0
        %993 = vmatpush1.bf16.msra.mxu0 0
        %994 = vmatprep.subr.bf16.mxu0 0
        %995 = vmatpush1.bf16.msra.mxu0 0
        %996 = vmatprep.subr.bf16.mxu0 0
        %997 = vmatpush1.bf16.msra.mxu0 0
        %998 = vmatprep.subr.bf16.mxu0 0
        %999 = vmatpush1.bf16.msra.mxu0 0
        %1000 = vmatprep.subr.bf16.mxu0 0
        %1001 = vmatpush1.bf16.msra.mxu0 0
        %1002 = vmatprep.subr.bf16.mxu0 0
        %1003 = vmatpush1.bf16.msra.mxu0 %v984
        %1004 = vmatprep.subr.bf16.mxu0 0
        %1005 = vmatpush1.bf16.msra.mxu0 %v983
        %1006 = vmatprep.subr.bf16.mxu0 0
        %1007 = vmatpush2.bf16.msra.mxu0 0
        %1008 = vmatprep.subr.bf16.mxu0 0
        %1009 = vmatpush2.bf16.msra.mxu0 0
        %1010 = vmatprep.subr.bf16.mxu0 0
        %1011 = vmatpush2.bf16.msra.mxu0 0
        %1012 = vmatprep.subr.bf16.mxu0 0
        %1013 = vmatpush2.bf16.msra.mxu0 0
        %1014 = vmatprep.subr.bf16.mxu0 0
        %1015 = vmatpush2.bf16.msra.mxu0 0
        %1016 = vmatprep.subr.bf16.mxu0 0
        %1017 = vmatpush2.bf16.msra.mxu0 0
        %1018 = vmatprep.subr.bf16.mxu0 0
        %1019 = vmatpush2.bf16.msra.mxu0 0
        %1020 = vmatprep.subr.bf16.mxu0 0
        %1021 = vmatpush2.bf16.msra.mxu0 0
        %1022 = vmatprep.mubr.bf16.mxu0 0
        %1023 = vmatmul.mubr.bf16.gmra.mxu0 %v988
        %v1024 = vpop.f32.mrf.mxu0
        %v1025 = vadd.f32 0.0, %v1024
        %v1026 = vpop.f32.mrf.mxu0
        %v1027 = vpop.f32.mrf.mxu0
        %v1028 = vadd.f32 0.0, %v1027
        %v1029 = vpop.f32.mrf.mxu0
        %1030 = vdwg.mxu0
        %v1031 = vadd.f32 %v965, %v1025
        %v1032 = vadd.f32 %v966, %v1028
        %v1033 = vxor.u32 %v1031, 2147483648
        %v1034 = vxor.u32 %v1032, 2147483648
        %v1035 = vmul.f32 %v1033, 1.442695
        %v1036 = vpow.pop %v1035
        %v1037 = vmul.f32 %v1034, 1.442695
        %v1038 = vpow.pop %v1037
        %v1039 = vadd.f32 %v1036, 1.0
        %v1040 = vadd.f32 %v1038, 1.0
        %v1041 = vrcp.pop %v1039
        %v1042 = vmul.f32 1.0, %v1041
        %v1043 = vrcp.pop %v1040
        %v1044 = vmul.f32 1.0, %v1043
        %v1045 = vadd.f32 %v1025, %v634
        %v1046 = vadd.f32 %v1028, %v634
        %1049 = vrot.lane.b32.xlu0 %v1045, 64
        %v1050 = vpop.permute.xlu0 %1049
        %1051 = vrot.lane.b32.xlu0 %v1046, 64
        %v1052 = vpop.permute.xlu0 %1051
        %v1055 = vmul.f32 %v1042, %v1050
        %v1056 = vmul.f32 %v1044, %v1052
        %1059 = vrot.lane.b32.xlu0 %v1055, 64
        %v1060 = vpop.permute.xlu0 %1059
        %1061 = vrot.lane.b32.xlu0 %v1056, 64
        %v1062 = vpop.permute.xlu0 %1061
        %v1065 = vadd.f32 %v965, %v1060
        %v1066 = vadd.f32 %v966, %v1062
        %v1067 = vtanh.pop %v1065
        %v1068 = vtanh.pop %v1066
        %v1069 = vsub.f32 1.0, %v1042
        %v1070 = vsub.f32 1.0, %v1044
        %1073 = vrot.lane.b32.xlu0 %v1067, 96
        %v1074 = vpop.permute.xlu0 %1073
        %1075 = vrot.lane.b32.xlu0 %v1068, 96
        %v1076 = vpop.permute.xlu0 %1075
        %v1079 = vmul.f32 %v1069, %v1074
        %v1080 = vmul.f32 %v1070, %v1076
        %v1081 = vmul.f32 %v1042, %v949
        %v1082 = vmul.f32 %v1044, %v950
        %v1083 = vadd.f32 %v1079, %v1081
        %v1084 = vadd.f32 %v1080, %v1082
        %1087 = vrot.lane.b32.xlu0 %v1083, 96
        %v1088 = vpop.permute.xlu0 %1087
        %1089 = vrot.lane.b32.xlu0 %v1084, 96
        %v1090 = vpop.permute.xlu0 %1089
        %s1093 = scalar_lea.vmem %s362, 48 [#allocation12]
        %1094 = vst.msk [vmem:[%s1093] sm:$0xff] %vm428, %v1088
        %1095 = vst.msk [vmem:[%s1093 + $0x8] sm:$0xff] %vm428, %v1090
        %1096 = vst.msk [vmem:[#allocation3] sm:$0xff] %vm428, %v1088
        %1097 = vst.msk [vmem:[#allocation3 + $0x8] sm:$0xff] %vm428, %v1090
        %s1098 = sand.u32 %s189, 1
        %s1099 = scalar_lea.sflag [#allocation6], %s1098
        %s1100 = sand.u32 %s189, 1
        %s1101 = smul.addr %s1100, 64
        %s1102 = scalar_lea.vmem [#allocation12], %s1101
        // Predicated region
        $region65: #{tpu_custom_call.1} parent=43 // pred_check
          %p1103 = pneg %p199
        $region66: #{tpu_custom_call.1} parent=43 // pred_check_branch
          %1105 = sbr.rel (%p1103) target = $region68
        $region67: #{tpu_custom_call.1} parent=43 // pred_region
          %s1106 = smul.u32 4, %s32
          %s1107 = smul.u32 2, %s31
          %s1109 = ssub.s32 1024, 1024
          %1110 = vsyncadd %s1099, %s1109
          %s1111 = smul.addr %s1106, 2
          %s1112 = sadd.s32 %s1107, %s1111
          %s1113 = smul.addr %s1112, 128
          %s1114 = scalar_lea.hbm %s6, %s1113
          %s1115 = sshll.u32 %s1102, 4
          %s1116 = int_to_ptr.vmem [resolvable:$true] %s1115
          %1121 = dma.vmem_to_hbm [thread:$0]  %s1116, 1024, %s1114, %s1099, 128, 128, 8
        $region68: #{tpu_custom_call.1} parent=43 // pred_fallthru
          _
      $region44: #{tpu_custom_call.1} parent=5 // pred_fallthru
        _
      %p1122 = scmp.le.s32.totalorder 2, %s22
      // Predicated region
      $region69: #{tpu_custom_call.1} parent=5 // pred_check
        %p1123 = pneg %p1122
      $region70: #{tpu_custom_call.1} parent=5 // pred_check_branch
        %1125 = sbr.rel (%p1123) target = $region72
      $region71: #{tpu_custom_call.1} parent=5 // pred_region
        %s1126 = ssub.s32 %s22, 2
        // Predicated region
        $region73: #{tpu_custom_call.1} parent=71 // pred_check
          %p1127 = pneg %p205
        $region74: #{tpu_custom_call.1} parent=71 // pred_check_branch
          %1129 = sbr.rel (%p1127) target = $region76
        $region75: #{tpu_custom_call.1} parent=71 // pred_region
          %s1130 = sand.u32 %s190, 1
          %s1131 = scalar_lea.sflag [#allocation6], %s1130
          %s1132 = sand.u32 %s190, 1
          %s1133 = smul.addr %s1132, 64
          %s1134 = scalar_lea.vmem [#allocation12], %s1133
          %1135 = dma.done %s1131, 1024
        $region76: #{tpu_custom_call.1} parent=71 // pred_fallthru
          _
      $region72: #{tpu_custom_call.1} parent=5 // pred_fallthru
        _
    $region6: #{tpu_custom_call.1} parent=1 // loop_footer
      %s26 = sadd.s32 1, %s22
    $region7: #{tpu_custom_call.1} parent=1 // loop_footer_branch
      %21 = sbr.rel target = $region3
    $region8: #{tpu_custom_call.1} parent=1 // loop_exit
      _
    %1136 = vsyncpa [#allocation5], 1
    %s1137 = scalar_lea.sflag [#allocation5], 1
    %1138 = vsyncpa %s1137, 1
    %1139 = vsyncpa [#allocation8], 1
    %s1140 = scalar_lea.sflag [#allocation8], 1
    %1141 = vsyncpa %s1140, 1
    %1142 = vsyncpa [#allocation11], 1
    %1143 = vsyncpa [#allocation6], 1
    %s1144 = scalar_lea.sflag [#allocation6], 1
    %1145 = vsyncpa %s1144, 1

</llo_original>
